<compile_context>
chip_gen: v7x
topology: tpu7x:2x2x1
jax: 0.10.0
libtpu: 0.0.40
codegen_flags: <defaults>
</compile_context>

<pallas_src>
import functools

import numpy as np
import jax
import jax.numpy as jnp
from jax import lax
from jax.experimental import pallas as pl
from jax.experimental.pallas import tpu as pltpu

RESOLUTION = 8   # voxel grid resolution r (V = r**3 = 512)
EPS = 0.0        # matches Voxelization(eps=0)


def _pick_tile(n, max_tile=1024):
    """Largest multiple-of-128 divisor of n that is <= max_tile (or n itself)."""
    if n % 128 != 0 or n <= 128:
        return n
    t = min(max_tile, n)
    t -= t % 128
    while n % t != 0:
        t -= 128
    return t


# --------------------------------------------------------------------------
# Kernel 1: coordinate normalization (both point clouds in ONE launch).
#   x1 coords -> normalized float coords nc1 (B, 3, N1)       (for devoxelize)
#   x2 coords -> rounded, flattened voxel index vidx (B,1,N2)  (for voxelize)
# --------------------------------------------------------------------------
def _normalize_kernel(c1_ref, c2_ref, nc1_ref, vidx_ref, *, resolution, eps):
    rf = float(resolution)
    r = resolution

    def norm(c):                                                       # (3, N)
        centered = c - jnp.mean(c, axis=1, keepdims=True)
        nrm = jnp.sqrt(jnp.sum(centered * centered, axis=0, keepdims=True))
        max_nrm = jnp.max(nrm, axis=1, keepdims=True)                  # (1, 1)
        denom = jnp.maximum(max_nrm * 2.0 + eps, 1e-12)  # guard degenerate clouds
        nc = centered / denom + 0.5
        return jnp.clip(nc * rf, 0.0, rf - 1.0)

    nc1_ref[0] = norm(c1_ref[0])                                       # (3, N1)
    nc2 = norm(c2_ref[0])                                              # (3, N2)
    vc = jnp.round(nc2).astype(jnp.int32)
    vidx_ref[0] = vc[0:1, :] * (r * r) + vc[1:2, :] * r + vc[2:3, :]   # (1, N2)


def _normalize_and_index(x1_coords, x2_coords, resolution, eps):
    B, _, N1 = x1_coords.shape
    N2 = x2_coords.shape[2]
    kernel = functools.partial(_normalize_kernel, resolution=resolution, eps=eps)
    return pl.pallas_call(
        kernel,
        out_shape=(jax.ShapeDtypeStruct((B, 3, N1), jnp.float32),
                   jax.ShapeDtypeStruct((B, 1, N2), jnp.int32)),
        grid_spec=pltpu.PrefetchScalarGridSpec(
            num_scalar_prefetch=0,
            grid=(B,),
            in_specs=[pl.BlockSpec((1, 3, N1), lambda b: (b, 0, 0)),
                      pl.BlockSpec((1, 3, N2), lambda b: (b, 0, 0))],
            out_specs=[pl.BlockSpec((1, 3, N1), lambda b: (b, 0, 0)),
                       pl.BlockSpec((1, 1, N2), lambda b: (b, 0, 0))],
        ),
        compiler_params=pltpu.CompilerParams(dimension_semantics=("parallel",)),
    )(x1_coords, x2_coords)


# --------------------------------------------------------------------------
# Kernel 2: avg_voxelize -> lane-dense (C2, V) grid.
#   * counts fused into the dot via an in-kernel ones row (no wrapper concat)
#   * one-hot built V-on-sublane so lane-dense vidx broadcasts for free
#   * grid (B, nv, nt2): B and V-chunk axes 'parallel', point axis 'arbitrary'
# --------------------------------------------------------------------------
def _voxelize_kernel(x2f_ref, vidx_ref, vox_ref, acc_ref, *, vchunk):
    v_idx = pl.program_id(1)
    n_idx = pl.program_id(2)

    @pl.when(n_idx == 0)
    def _():
        acc_ref[...] = jnp.zeros_like(acc_ref)

    x2f = x2f_ref[0]                                                   # (C2, TN2)
    c2, tn2 = x2f.shape

    # augmented LHS: rows 0..C2-1 = features, row C2 = ones (-> voxel counts)
    lhs_aug = jnp.concatenate([x2f, jnp.ones((1, tn2), jnp.float32)], axis=0)

    # one-hot^T (Vc, TN2): sublane iota vs lane-dense local voxel index.
    local = vidx_ref[0] - v_idx * vchunk                               # (1, TN2)
    iota_v = lax.broadcasted_iota(jnp.int32, (vchunk, tn2), 0)         # (Vc, TN2)
    onehot_t = (iota_v == local).astype(jnp.float32)                   # (Vc, TN2)

    # single MXU dot (contracting the point dim of both operands, q@k.T style):
    # rows 0..C2-1 = per-voxel feature sums, row C2 = per-voxel point counts.
    acc_ref[...] += lax.dot_general(
        lhs_aug, onehot_t,
        dimension_numbers=(((1,), (1,)), ((), ())),
        preferred_element_type=jnp.float32)                            # (C2+1, Vc)

    @pl.when(n_idx == pl.num_programs(2) - 1)
    def _():
        counts = acc_ref[c2:c2 + 1, :]                                 # (1, Vc)
        vox_ref[0] = acc_ref[0:c2, :] / jnp.maximum(counts, 1.0)       # (C2, Vc)


def _avg_voxelize(x2_features, vidx, resolution, max_tile):
    B, C2, N2 = x2_features.shape
    V = resolution ** 3
    tn2 = _pick_tile(N2, max_tile)
    nt2 = N2 // tn2
    nv = 2 if (V % 256 == 0) else 1        # parallel V split (keeps v7x TC#1 busy)
    vchunk = V // nv

    kernel = functools.partial(_voxelize_kernel, vchunk=vchunk)
    flops = int(2 * B * (C2 + 1) * N2 * V)
    bytes_accessed = int(4 * (x2_features.size + vidx.size + B * C2 * V))
    return pl.pallas_call(
        kernel,
        out_shape=jax.ShapeDtypeStruct((B, C2, V), jnp.float32),
        grid_spec=pltpu.PrefetchScalarGridSpec(
            num_scalar_prefetch=0,
            grid=(B, nv, nt2),
            in_specs=[
                pl.BlockSpec((1, C2, tn2), lambda b, v, n: (b, 0, n)),
                pl.BlockSpec((1, 1, tn2), lambda b, v, n: (b, 0, n)),
            ],
            out_specs=pl.BlockSpec((1, C2, vchunk), lambda b, v, n: (b, 0, v)),
            scratch_shapes=[pltpu.VMEM((C2 + 1, vchunk), jnp.float32)],
        ),
        compiler_params=pltpu.CompilerParams(
            dimension_semantics=("parallel", "parallel", "arbitrary")),
        cost_estimate=pl.CostEstimate(
            flops=flops, transcendentals=0, bytes_accessed=bytes_accessed),
    )(x2_features, vidx)


# --------------------------------------------------------------------------
# Kernel 3: trilinear devoxelize (factorized weights, ONE matmul) + fused
#           channel concat with x1_features.
# --------------------------------------------------------------------------
def _devox_concat_kernel(vox_ref, nc1_ref, x1f_ref, o_ref, *, resolution):
    r = resolution
    V = r * r * r
    vox = vox_ref[0]                                                   # (C2, V)
    nc1 = nc1_ref[0]                                                   # (3, TN1)
    c2 = vox.shape[0]
    c1 = x1f_ref.shape[1]
    tn1 = nc1.shape[1]

    xc, yc, zc = nc1[0:1, :], nc1[1:2, :], nc1[2:3, :]                 # (1, TN1)
    x0 = jnp.floor(xc); fx = xc - x0
    y0 = jnp.floor(yc); fy = yc - y0
    z0 = jnp.floor(zc); fz = zc - z0
    x0i = x0.astype(jnp.int32); x1i = jnp.minimum(x0i + 1, r - 1)
    y0i = y0.astype(jnp.int32); y1i = jnp.minimum(y0i + 1, r - 1)
    z0i = z0.astype(jnp.int32); z1i = jnp.minimum(z0i + 1, r - 1)

    # Factorized trilinear weights: per-axis (r, TN1) rows, two where's each.
    # NOTE: at the clamped upper boundary (x0i == x1i) both contributions land
    # on the same row and sum to 1 — intentionally matches PVCNN edge handling.
    iota_r = lax.broadcasted_iota(jnp.int32, (r, tn1), 0)
    wx = jnp.where(iota_r == x0i, 1.0 - fx, 0.0) + jnp.where(iota_r == x1i, fx, 0.0)
    wy = jnp.where(iota_r == y0i, 1.0 - fy, 0.0) + jnp.where(iota_r == y1i, fy, 0.0)
    wz = jnp.where(iota_r == z0i, 1.0 - fz, 0.0) + jnp.where(iota_r == z1i, fz, 0.0)

    # W(V, TN1) via two broadcast multiplies; staged 3-D reshapes keep the
    # collapsed dim equal to the sublane tile (8) so no copy is materialized.
    wxy = (wx[:, None, :] * wy[None, :, :]).reshape(r * r, tn1)        # (r^2, TN1)
    w = (wxy[:, None, :] * wz[None, :, :]).reshape(V, tn1)             # (V, TN1)

    devox = lax.dot_general(
        vox, w,
        dimension_numbers=(((1,), (0,)), ((), ())),
        preferred_element_type=jnp.float32)                            # (C2, TN1)

    # fused channel concat: output block = [x1_features ; devox]
    o_ref[0, 0:c1, :] = x1f_ref[0]
    o_ref[0, c1:c1 + c2, :] = devox.astype(o_ref.dtype)


def _devox_and_concat(vox, nc1, x1_features, resolution, max_tile):
    B, C2, V = vox.shape
    C1, N1 = x1_features.shape[1], x1_features.shape[2]
    tn1 = _pick_tile(N1, max_tile)
    if B == 1 and N1 % 256 == 0:
        # give the second TensorCore (v7x) work even at batch 1
        tn1 = min(tn1, _pick_tile(N1, max(128, N1 // 2)))
    nt1 = N1 // tn1

    kernel = functools.partial(_devox_concat_kernel, resolution=resolution)
    flops = int(2 * B * C2 * V * N1 + 3 * B * V * N1)
    bytes_accessed = int(4 * (B * C2 * V + nc1.size + x1_features.size
                              + B * (C1 + C2) * N1))
    return pl.pallas_call(
        kernel,
        out_shape=jax.ShapeDtypeStruct((B, C1 + C2, N1), jnp.float32),
        grid_spec=pltpu.PrefetchScalarGridSpec(
            num_scalar_prefetch=0,
            grid=(B, nt1),
            in_specs=[
                pl.BlockSpec((1, C2, V), lambda b, n: (b, 0, 0)),
                pl.BlockSpec((1, 3, tn1), lambda b, n: (b, 0, n)),
                pl.BlockSpec((1, C1, tn1), lambda b, n: (b, 0, n)),
            ],
            out_specs=pl.BlockSpec((1, C1 + C2, tn1), lambda b, n: (b, 0, n)),
        ),
        compiler_params=pltpu.CompilerParams(
            dimension_semantics=("parallel", "parallel")),
        cost_estimate=pl.CostEstimate(
            flops=flops, transcendentals=0, bytes_accessed=bytes_accessed),
    )(vox, nc1, x1_features)


# --------------------------------------------------------------------------
# Full forward (matches FeatureVoxelConcatenation.forward; vox_x1 is never
# used by the reference module, so it is not computed here either).
# --------------------------------------------------------------------------
@functools.partial(jax.jit, static_argnames=("resolution", "eps", "max_tile"))
def feature_voxel_concatenation(x1_features, x2_features, x1_coords, x2_coords,
                                resolution=RESOLUTION, eps=EPS, max_tile=1024):
    x1_features = x1_features.astype(jnp.float32)
    x2_features = x2_features.astype(jnp.float32)
    x1_coords = x1_coords.astype(jnp.float32)
    x2_coords = x2_coords.astype(jnp.float32)

    nc1, vidx2 = _normalize_and_index(x1_coords, x2_coords, resolution, eps)
    vox = _avg_voxelize(x2_features, vidx2, resolution, max_tile)      # (B, C2, V)
    return _devox_and_concat(vox, nc1, x1_features, resolution, max_tile)


# --------------------------------------------------------------------------
# Pure numpy reference (scalar loops) mirroring PVCNN semantics
# --------------------------------------------------------------------------
def _reference_forward(x1f, x2f, x1c, x2c, r, eps):
    x1f = x1f.astype(np.float64); x2f = x2f.astype(np.float64)
    x1c = x1c.astype(np.float64); x2c = x2c.astype(np.float64)

    def norm_coords(c):
        centered = c - c.mean(axis=2, keepdims=True)
        nrm = np.linalg.norm(centered, axis=1, keepdims=True)
        mx = nrm.max(axis=2, keepdims=True)
        nc = centered / (mx * 2.0 + eps) + 0.5
        return np.clip(nc * r, 0.0, r - 1.0)

    nc1 = norm_coords(x1c)
    nc2 = norm_coords(x2c)
    B, C2, N2 = x2f.shape
    N1 = x1f.shape[2]
    V = r ** 3
    vox = np.zeros((B, C2, V))
    cnt = np.zeros((B, V))
    vidx = np.rint(nc2).astype(np.int64)
    for b in range(B):
        for n in range(N2):
            i = vidx[b, 0, n] * r * r + vidx[b, 1, n] * r + vidx[b, 2, n]
            vox[b, :, i] += x2f[b, :, n]
            cnt[b, i] += 1.0
    vox = vox / np.maximum(cnt, 1.0)[:, None, :]

    devox = np.zeros((B, C2, N1))
    for b in range(B):
        for n in range(N1):
            x, y, z = nc1[b, :, n]
            x0, y0, z0 = int(np.floor(x)), int(np.floor(y)), int(np.floor(z))
            fx, fy, fz = x - x0, y - y0, z - z0
            x1i, y1i, z1i = min(x0 + 1, r - 1), min(y0 + 1, r - 1), min(z0 + 1, r - 1)
            for xi, wx in ((x0, 1.0 - fx), (x1i, fx)):
                for yi, wy in ((y0, 1.0 - fy), (y1i, fy)):
                    for zi, wz in ((z0, 1.0 - fz), (z1i, fz)):
                        devox[b, :, n] += wx * wy * wz * vox[b, :, xi * r * r + yi * r + zi]
    return np.concatenate([x1f, devox], axis=1).astype(np.float32)


if __name__ == "__main__":
    key = jax.random.PRNGKey(0)
    k1, k2, k3, k4 = jax.random.split(key, 4)
    B, C1, C2, N1, N2 = 2, 8, 8, 128, 128

    x1f = jax.random.normal(k1, (B, C1, N1), jnp.float32)
    x2f = jax.random.normal(k2, (B, C2, N2), jnp.float32)
    x1c = jax.random.uniform(k3, (B, 3, N1), jnp.float32, minval=-1.0, maxval=1.0)
    x2c = jax.random.uniform(k4, (B, 3, N2), jnp.float32, minval=-1.0, maxval=1.0)

    out = feature_voxel_concatenation(x1f, x2f, x1c, x2c)
    out = jax.block_until_ready(out)
    assert out.shape == (B, C1 + C2, N1)

    ref = _reference_forward(np.asarray(x1f), np.asarray(x2f),
                             np.asarray(x1c), np.asarray(x2c), RESOLUTION, EPS)
    diff = np.abs(np.asarray(out) - ref)
    # tolerate rare fp32-vs-fp64 rounding ties at voxel boundaries
    mismatch_frac = float(np.mean(diff > 1e-3))
    assert mismatch_frac < 0.02, f"mismatch_frac={mismatch_frac}, max_diff={diff.max()}"

    print("KERNEL_OK")
</pallas_src>

<mosaic_0001>
module attributes {stable_mosaic.version = 11 : i64} {
  func.func @_voxelize_kernel(%arg0: i32, %arg1: i32, %arg2: i32, %arg3: memref<1x8x128xf32, #tpu.memory_space<vmem>>, %arg4: memref<1x1x128xi32, #tpu.memory_space<vmem>>, %arg5: memref<1x8x256xf32, #tpu.memory_space<vmem>>, %arg6: memref<9x256xf32, #tpu.memory_space<vmem>>) attributes {dimension_semantics = [#tpu.dimension_semantics<parallel>, #tpu.dimension_semantics<parallel>, #tpu.dimension_semantics<arbitrary>], iteration_bounds = array<i64: 2, 2, 1>, scalar_prefetch = 0 : i64, scratch_operands = 1 : i64, tpu.core_type = #tpu.core_type<tc>, window_params = [{transform_indices = @transform_0, window_bounds = array<i64: 1, 8, 128>}, {transform_indices = @transform_1, window_bounds = array<i64: 1, 1, 128>}, {transform_indices = @transform_2, window_bounds = array<i64: 1, 8, 256>}]} {
    %c0_i32 = arith.constant 0 : i32
    %0 = arith.cmpi eq, %arg2, %c0_i32 : i32
    %1 = arith.extui %0 : i1 to i32
    %c0_i32_0 = arith.constant 0 : i32
    %2 = arith.cmpi ne, %1, %c0_i32_0 : i32
    scf.if %2 {
      %cst_13 = arith.constant 0.000000e+00 : f32
      %24 = vector.broadcast %cst_13 : f32 to vector<9x256xf32>
      %c0_14 = arith.constant 0 : index
      %c0_15 = arith.constant 0 : index
      %25 = vector.load %arg6[%c0_14, %c0_15] : memref<9x256xf32, #tpu.memory_space<vmem>>, vector<9x256xf32>
      tpu.vector_store %arg6[%c0_14, %c0_15], %24 {strides = array<i32>} : memref<9x256xf32, #tpu.memory_space<vmem>>, vector<9x256xf32>,
    } else {
    }
    %c0 = arith.constant 0 : index
    %c0_1 = arith.constant 0 : index
    %c0_2 = arith.constant 0 : index
    %3 = vector.load %arg3[%c0, %c0_1, %c0_2] : memref<1x8x128xf32, #tpu.memory_space<vmem>>, vector<1x8x128xf32>
    %4 = vector.shape_cast %3 : vector<1x8x128xf32> to vector<8x128xf32>
    %cst = arith.constant 1.000000e+00 : f32
    %5 = vector.broadcast %cst : f32 to vector<1x128xf32>
    %6 = tpu.concatenate %4, %5 in 0 : vector<8x128xf32>, vector<1x128xf32> -> vector<9x128xf32>
    %c0_3 = arith.constant 0 : index
    %c0_4 = arith.constant 0 : index
    %c0_5 = arith.constant 0 : index
    %7 = vector.load %arg4[%c0_3, %c0_4, %c0_5] : memref<1x1x128xi32, #tpu.memory_space<vmem>>, vector<1x1x128xi32>
    %8 = vector.shape_cast %7 : vector<1x1x128xi32> to vector<1x128xi32>
    %c256_i32 = arith.constant 256 : i32
    %9 = arith.muli %arg1, %c256_i32 : i32
    %10 = vector.broadcast %9 : i32 to vector<1x128xi32>
    %11 = arith.subi %8, %10 : vector<1x128xi32>
    %12 = tpu.iota {dimensions = array<i32: 0>} : vector<256x128xi32>
    %13 = vector.broadcast %11 : vector<1x128xi32> to vector<256x128xi32>
    %14 = arith.cmpi eq, %12, %13 : vector<256x128xi32>
    %15 = arith.extui %14 : vector<256x128xi1> to vector<256x128xi32>
    %16 = arith.sitofp %15 : vector<256x128xi32> to vector<256x128xf32>
    %c0_6 = arith.constant 0 : index
    %c0_7 = arith.constant 0 : index
    %17 = vector.load %arg6[%c0_6, %c0_7] : memref<9x256xf32, #tpu.memory_space<vmem>>, vector<9x256xf32>
    %cst_8 = arith.constant dense<0.000000e+00> : vector<9x256xf32>
    %18 = tpu.matmul %6, %16, %cst_8 {dimension_numbers = #tpu.dot_dimension_numbers<[1], [1], [0], [0], [0, 0, 1, 0], [], []>} : vector<9x128xf32>, vector<256x128xf32>, vector<9x256xf32> -> vector<9x256xf32>
    %19 = arith.addf %17, %18 : vector<9x256xf32>
    %c0_9 = arith.constant 0 : index
    %c0_10 = arith.constant 0 : index
    %20 = vector.load %arg6[%c0_9, %c0_10] : memref<9x256xf32, #tpu.memory_space<vmem>>, vector<9x256xf32>
    tpu.vector_store %arg6[%c0_9, %c0_10], %19 {strides = array<i32>} : memref<9x256xf32, #tpu.memory_space<vmem>>, vector<9x256xf32>,
    %c0_i32_11 = arith.constant 0 : i32
    %21 = arith.cmpi eq, %arg2, %c0_i32_11 : i32
    %22 = arith.extui %21 : i1 to i32
    %c0_i32_12 = arith.constant 0 : i32
    %23 = arith.cmpi ne, %22, %c0_i32_12 : i32
    scf.if %23 {
      %c8 = arith.constant 8 : index
      %c0_13 = arith.constant 0 : index
      %24 = vector.load %arg6[%c8, %c0_13] : memref<9x256xf32, #tpu.memory_space<vmem>>, vector<1x256xf32>
      %c0_14 = arith.constant 0 : index
      %c0_15 = arith.constant 0 : index
      %25 = vector.load %arg6[%c0_14, %c0_15] : memref<9x256xf32, #tpu.memory_space<vmem>>, vector<8x256xf32>
      %cst_16 = arith.constant 1.000000e+00 : f32
      %26 = vector.broadcast %cst_16 : f32 to vector<1x256xf32>
      %27 = arith.maximumf %24, %26 : vector<1x256xf32>
      %28 = vector.broadcast %27 : vector<1x256xf32> to vector<8x256xf32>
      %29 = arith.divf %25, %28 : vector<8x256xf32>
      %c0_17 = arith.constant 0 : index
      %c0_18 = arith.constant 0 : index
      %c0_19 = arith.constant 0 : index
      %30 = vector.load %arg5[%c0_17, %c0_18, %c0_19] : memref<1x8x256xf32, #tpu.memory_space<vmem>>, vector<1x8x256xf32>
      %31 = vector.shape_cast %30 : vector<1x8x256xf32> to vector<8x256xf32>
      %32 = vector.shape_cast %29 : vector<8x256xf32> to vector<1x8x256xf32>
      tpu.vector_store %arg5[%c0_17, %c0_18, %c0_19], %32 {strides = array<i32>} : memref<1x8x256xf32, #tpu.memory_space<vmem>>, vector<1x8x256xf32>,
    } else {
    }
    return
  }
  func.func @transform_0(%arg0: i32, %arg1: i32, %arg2: i32) -> (i32, i32, i32) {
    %c0_i32 = arith.constant 0 : i32
    %c0_i32_0 = arith.constant 0 : i32
    return %arg0, %c0_i32, %arg2 : i32, i32, i32
  }
  func.func @transform_1(%arg0: i32, %arg1: i32, %arg2: i32) -> (i32, i32, i32) {
    %c0_i32 = arith.constant 0 : i32
    %c0_i32_0 = arith.constant 0 : i32
    return %arg0, %c0_i32, %arg2 : i32, i32, i32
  }
  func.func @transform_2(%arg0: i32, %arg1: i32, %arg2: i32) -> (i32, i32, i32) {
    %c0_i32 = arith.constant 0 : i32
    %c0_i32_0 = arith.constant 0 : i32
    return %arg0, %c0_i32, %arg1 : i32, i32, i32
  }
}

module attributes {stable_mosaic.version = 11 : i64} {
  func.func @_devox_concat_kernel(%arg0: i32, %arg1: i32, %arg2: memref<1x8x512xf32, #tpu.memory_space<vmem>>, %arg3: memref<1x3x128xf32, #tpu.memory_space<vmem>>, %arg4: memref<1x8x128xf32, #tpu.memory_space<vmem>>, %arg5: memref<1x16x128xf32, #tpu.memory_space<vmem>>) attributes {dimension_semantics = [#tpu.dimension_semantics<parallel>, #tpu.dimension_semantics<parallel>], iteration_bounds = array<i64: 2, 1>, scalar_prefetch = 0 : i64, scratch_operands = 0 : i64, tpu.core_type = #tpu.core_type<tc>, window_params = [{transform_indices = @transform_0, window_bounds = array<i64: 1, 8, 512>}, {transform_indices = @transform_1, window_bounds = array<i64: 1, 3, 128>}, {transform_indices = @transform_2, window_bounds = array<i64: 1, 8, 128>}, {transform_indices = @transform_3, window_bounds = array<i64: 1, 16, 128>}]} {
    %c0 = arith.constant 0 : index
    %c0_0 = arith.constant 0 : index
    %c0_1 = arith.constant 0 : index
    %0 = vector.load %arg2[%c0, %c0_0, %c0_1] : memref<1x8x512xf32, #tpu.memory_space<vmem>>, vector<1x8x512xf32>
    %1 = vector.shape_cast %0 : vector<1x8x512xf32> to vector<8x512xf32>
    %c0_2 = arith.constant 0 : index
    %c0_3 = arith.constant 0 : index
    %c0_4 = arith.constant 0 : index
    %2 = vector.load %arg3[%c0_2, %c0_3, %c0_4] : memref<1x3x128xf32, #tpu.memory_space<vmem>>, vector<1x3x128xf32>
    %3 = vector.shape_cast %2 : vector<1x3x128xf32> to vector<3x128xf32>
    %4 = vector.extract_strided_slice %3 {offsets = [0, 0], sizes = [1, 128], strides = [1, 1]} : vector<3x128xf32> to vector<1x128xf32>
    %5 = vector.extract_strided_slice %3 {offsets = [1, 0], sizes = [1, 128], strides = [1, 1]} : vector<3x128xf32> to vector<1x128xf32>
    %6 = vector.extract_strided_slice %3 {offsets = [2, 0], sizes = [1, 128], strides = [1, 1]} : vector<3x128xf32> to vector<1x128xf32>
    %7 = math.floor %4 : vector<1x128xf32>
    %8 = arith.subf %4, %7 : vector<1x128xf32>
    %9 = math.floor %5 : vector<1x128xf32>
    %10 = arith.subf %5, %9 : vector<1x128xf32>
    %11 = math.floor %6 : vector<1x128xf32>
    %12 = arith.subf %6, %11 : vector<1x128xf32>
    %13 = arith.fptosi %7 : vector<1x128xf32> to vector<1x128xi32>
    %c1_i32 = arith.constant 1 : i32
    %14 = vector.broadcast %c1_i32 : i32 to vector<1x128xi32>
    %15 = arith.addi %13, %14 : vector<1x128xi32>
    %c7_i32 = arith.constant 7 : i32
    %16 = vector.broadcast %c7_i32 : i32 to vector<1x128xi32>
    %17 = arith.minsi %15, %16 : vector<1x128xi32>
    %18 = arith.fptosi %9 : vector<1x128xf32> to vector<1x128xi32>
    %c1_i32_5 = arith.constant 1 : i32
    %19 = vector.broadcast %c1_i32_5 : i32 to vector<1x128xi32>
    %20 = arith.addi %18, %19 : vector<1x128xi32>
    %c7_i32_6 = arith.constant 7 : i32
    %21 = vector.broadcast %c7_i32_6 : i32 to vector<1x128xi32>
    %22 = arith.minsi %20, %21 : vector<1x128xi32>
    %23 = arith.fptosi %11 : vector<1x128xf32> to vector<1x128xi32>
    %c1_i32_7 = arith.constant 1 : i32
    %24 = vector.broadcast %c1_i32_7 : i32 to vector<1x128xi32>
    %25 = arith.addi %23, %24 : vector<1x128xi32>
    %c7_i32_8 = arith.constant 7 : i32
    %26 = vector.broadcast %c7_i32_8 : i32 to vector<1x128xi32>
    %27 = arith.minsi %25, %26 : vector<1x128xi32>
    %28 = tpu.iota {dimensions = array<i32: 0>} : vector<8x128xi32>
    %29 = vector.broadcast %13 : vector<1x128xi32> to vector<8x128xi32>
    %30 = arith.cmpi eq, %28, %29 : vector<8x128xi32>
    %cst = arith.constant 1.000000e+00 : f32
    %31 = vector.broadcast %cst : f32 to vector<1x128xf32>
    %32 = arith.subf %31, %8 : vector<1x128xf32>
    %cst_9 = arith.constant 0.000000e+00 : f32
    %33 = vector.shape_cast %32 : vector<1x128xf32> to vector<1x128xf32>
    %34 = vector.broadcast %33 : vector<1x128xf32> to vector<8x128xf32>
    %35 = vector.broadcast %cst_9 : f32 to vector<8x128xf32>
    %36 = arith.select %30, %34, %35 : vector<8x128xi1>, vector<8x128xf32>
    %37 = vector.broadcast %17 : vector<1x128xi32> to vector<8x128xi32>
    %38 = arith.cmpi eq, %28, %37 : vector<8x128xi32>
    %cst_10 = arith.constant 0.000000e+00 : f32
    %39 = vector.shape_cast %8 : vector<1x128xf32> to vector<1x128xf32>
    %40 = vector.broadcast %39 : vector<1x128xf32> to vector<8x128xf32>
    %41 = vector.broadcast %cst_10 : f32 to vector<8x128xf32>
    %42 = arith.select %38, %40, %41 : vector<8x128xi1>, vector<8x128xf32>
    %43 = arith.addf %36, %42 : vector<8x128xf32>
    %44 = vector.broadcast %18 : vector<1x128xi32> to vector<8x128xi32>
    %45 = arith.cmpi eq, %28, %44 : vector<8x128xi32>
    %cst_11 = arith.constant 1.000000e+00 : f32
    %46 = vector.broadcast %cst_11 : f32 to vector<1x128xf32>
    %47 = arith.subf %46, %10 : vector<1x128xf32>
    %cst_12 = arith.constant 0.000000e+00 : f32
    %48 = vector.shape_cast %47 : vector<1x128xf32> to vector<1x128xf32>
    %49 = vector.broadcast %48 : vector<1x128xf32> to vector<8x128xf32>
    %50 = vector.broadcast %cst_12 : f32 to vector<8x128xf32>
    %51 = arith.select %45, %49, %50 : vector<8x128xi1>, vector<8x128xf32>
    %52 = vector.broadcast %22 : vector<1x128xi32> to vector<8x128xi32>
    %53 = arith.cmpi eq, %28, %52 : vector<8x128xi32>
    %cst_13 = arith.constant 0.000000e+00 : f32
    %54 = vector.shape_cast %10 : vector<1x128xf32> to vector<1x128xf32>
    %55 = vector.broadcast %54 : vector<1x128xf32> to vector<8x128xf32>
    %56 = vector.broadcast %cst_13 : f32 to vector<8x128xf32>
    %57 = arith.select %53, %55, %56 : vector<8x128xi1>, vector<8x128xf32>
    %58 = arith.addf %51, %57 : vector<8x128xf32>
    %59 = vector.broadcast %23 : vector<1x128xi32> to vector<8x128xi32>
    %60 = arith.cmpi eq, %28, %59 : vector<8x128xi32>
    %cst_14 = arith.constant 1.000000e+00 : f32
    %61 = vector.broadcast %cst_14 : f32 to vector<1x128xf32>
    %62 = arith.subf %61, %12 : vector<1x128xf32>
    %cst_15 = arith.constant 0.000000e+00 : f32
    %63 = vector.shape_cast %62 : vector<1x128xf32> to vector<1x128xf32>
    %64 = vector.broadcast %63 : vector<1x128xf32> to vector<8x128xf32>
    %65 = vector.broadcast %cst_15 : f32 to vector<8x128xf32>
    %66 = arith.select %60, %64, %65 : vector<8x128xi1>, vector<8x128xf32>
    %67 = vector.broadcast %27 : vector<1x128xi32> to vector<8x128xi32>
    %68 = arith.cmpi eq, %28, %67 : vector<8x128xi32>
    %cst_16 = arith.constant 0.000000e+00 : f32
    %69 = vector.shape_cast %12 : vector<1x128xf32> to vector<1x128xf32>
    %70 = vector.broadcast %69 : vector<1x128xf32> to vector<8x128xf32>
    %71 = vector.broadcast %cst_16 : f32 to vector<8x128xf32>
    %72 = arith.select %68, %70, %71 : vector<8x128xi1>, vector<8x128xf32>
    %73 = arith.addf %66, %72 : vector<8x128xf32>
    %74 = vector.shape_cast %43 : vector<8x128xf32> to vector<8x1x128xf32>
    %75 = vector.shape_cast %58 : vector<8x128xf32> to vector<1x8x128xf32>
    %76 = vector.broadcast %74 : vector<8x1x128xf32> to vector<8x8x128xf32>
    %77 = vector.broadcast %75 : vector<1x8x128xf32> to vector<8x8x128xf32>
    %78 = arith.mulf %76, %77 : vector<8x8x128xf32>
    %79 = vector.shape_cast %78 : vector<8x8x128xf32> to vector<64x128xf32>
    %80 = vector.shape_cast %79 : vector<64x128xf32> to vector<64x1x128xf32>
    %81 = vector.shape_cast %73 : vector<8x128xf32> to vector<1x8x128xf32>
    %82 = vector.broadcast %80 : vector<64x1x128xf32> to vector<64x8x128xf32>
    %83 = vector.broadcast %81 : vector<1x8x128xf32> to vector<64x8x128xf32>
    %84 = arith.mulf %82, %83 : vector<64x8x128xf32>
    %85 = vector.shape_cast %84 : vector<64x8x128xf32> to vector<512x128xf32>
    %cst_17 = arith.constant dense<0.000000e+00> : vector<8x128xf32>
    %86 = tpu.matmul %1, %85, %cst_17 {dimension_numbers = #tpu.dot_dimension_numbers<[1], [0], [0], [1], [0, 0, 1, 1], [], []>} : vector<8x512xf32>, vector<512x128xf32>, vector<8x128xf32> -> vector<8x128xf32>
    %c0_18 = arith.constant 0 : index
    %c0_19 = arith.constant 0 : index
    %c0_20 = arith.constant 0 : index
    %87 = vector.load %arg4[%c0_18, %c0_19, %c0_20] : memref<1x8x128xf32, #tpu.memory_space<vmem>>, vector<1x8x128xf32>
    %88 = vector.shape_cast %87 : vector<1x8x128xf32> to vector<8x128xf32>
    %c0_21 = arith.constant 0 : index
    %c0_22 = arith.constant 0 : index
    %c0_23 = arith.constant 0 : index
    %89 = vector.load %arg5[%c0_21, %c0_22, %c0_23] : memref<1x16x128xf32, #tpu.memory_space<vmem>>, vector<1x8x128xf32>
    %90 = vector.shape_cast %89 : vector<1x8x128xf32> to vector<8x128xf32>
    %91 = vector.shape_cast %88 : vector<8x128xf32> to vector<1x8x128xf32>
    tpu.vector_store %arg5[%c0_21, %c0_22, %c0_23], %91 {strides = array<i32>} : memref<1x16x128xf32, #tpu.memory_space<vmem>>, vector<1x8x128xf32>,
    %c0_24 = arith.constant 0 : index
    %c8 = arith.constant 8 : index
    %c0_25 = arith.constant 0 : index
    %92 = vector.load %arg5[%c0_24, %c8, %c0_25] : memref<1x16x128xf32, #tpu.memory_space<vmem>>, vector<1x8x128xf32>
    %93 = vector.shape_cast %92 : vector<1x8x128xf32> to vector<8x128xf32>
    %94 = vector.shape_cast %86 : vector<8x128xf32> to vector<1x8x128xf32>
    tpu.vector_store %arg5[%c0_24, %c8, %c0_25], %94 {strides = array<i32>} : memref<1x16x128xf32, #tpu.memory_space<vmem>>, vector<1x8x128xf32>,
    return
  }
  func.func @transform_0(%arg0: i32, %arg1: i32) -> (i32, i32, i32) {
    %c0_i32 = arith.constant 0 : i32
    %c0_i32_0 = arith.constant 0 : i32
    %c0_i32_1 = arith.constant 0 : i32
    return %arg0, %c0_i32, %c0_i32_0 : i32, i32, i32
  }
  func.func @transform_1(%arg0: i32, %arg1: i32) -> (i32, i32, i32) {
    %c0_i32 = arith.constant 0 : i32
    %c0_i32_0 = arith.constant 0 : i32
    return %arg0, %c0_i32, %arg1 : i32, i32, i32
  }
  func.func @transform_2(%arg0: i32, %arg1: i32) -> (i32, i32, i32) {
    %c0_i32 = arith.constant 0 : i32
    %c0_i32_0 = arith.constant 0 : i32
    return %arg0, %c0_i32, %arg1 : i32, i32, i32
  }
  func.func @transform_3(%arg0: i32, %arg1: i32) -> (i32, i32, i32) {
    %c0_i32 = arith.constant 0 : i32
    %c0_i32_0 = arith.constant 0 : i32
    return %arg0, %c0_i32, %arg1 : i32, i32, i32
  }
}

module attributes {stable_mosaic.version = 11 : i64} {
  func.func @_normalize_kernel(%arg0: i32, %arg1: memref<1x3x128xf32, #tpu.memory_space<vmem>>, %arg2: memref<1x3x128xf32, #tpu.memory_space<vmem>>, %arg3: memref<1x3x128xf32, #tpu.memory_space<vmem>>, %arg4: memref<1x1x128xi32, #tpu.memory_space<vmem>>) attributes {dimension_semantics = [#tpu.dimension_semantics<parallel>], iteration_bounds = array<i64: 2>, scalar_prefetch = 0 : i64, scratch_operands = 0 : i64, tpu.core_type = #tpu.core_type<tc>, window_params = [{transform_indices = @transform_0, window_bounds = array<i64: 1, 3, 128>}, {transform_indices = @transform_1, window_bounds = array<i64: 1, 3, 128>}, {transform_indices = @transform_2, window_bounds = array<i64: 1, 3, 128>}, {transform_indices = @transform_3, window_bounds = array<i64: 1, 1, 128>}]} {
    %c0 = arith.constant 0 : index
    %c0_0 = arith.constant 0 : index
    %c0_1 = arith.constant 0 : index
    %0 = vector.load %arg1[%c0, %c0_0, %c0_1] : memref<1x3x128xf32, #tpu.memory_space<vmem>>, vector<1x3x128xf32>
    %1 = vector.shape_cast %0 : vector<1x3x128xf32> to vector<3x128xf32>
    %cst = arith.constant dense<0.000000e+00> : vector<3xf32>
    %2 = vector.multi_reduction <add>, %1, %cst [1] : vector<3x128xf32> to vector<3xf32>
    %3 = vector.shape_cast %2 : vector<3xf32> to vector<3x1xf32>
    %cst_2 = arith.constant 1.280000e+02 : f32
    %4 = vector.broadcast %cst_2 : f32 to vector<3x1xf32>
    %5 = arith.divf %3, %4 : vector<3x1xf32>
    %6 = vector.broadcast %5 : vector<3x1xf32> to vector<3x128xf32>
    %7 = arith.subf %1, %6 : vector<3x128xf32>
    %8 = arith.mulf %7, %7 : vector<3x128xf32>
    %cst_3 = arith.constant dense<0.000000e+00> : vector<128xf32>
    %9 = vector.multi_reduction <add>, %8, %cst_3 [0] : vector<3x128xf32> to vector<128xf32>
    %10 = vector.shape_cast %9 : vector<128xf32> to vector<1x128xf32>
    %11 = math.sqrt %10 : vector<1x128xf32>
    %cst_4 = arith.constant dense<0xFF800000> : vector<1xf32>
    %12 = vector.multi_reduction <maximumf>, %11, %cst_4 [1] : vector<1x128xf32> to vector<1xf32>
    %13 = vector.shape_cast %12 : vector<1xf32> to vector<1x1xf32>
    %cst_5 = arith.constant 2.000000e+00 : f32
    %14 = vector.broadcast %cst_5 : f32 to vector<1x1xf32>
    %15 = arith.mulf %13, %14 : vector<1x1xf32>
    %cst_6 = arith.constant 0.000000e+00 : f32
    %16 = vector.broadcast %cst_6 : f32 to vector<1x1xf32>
    %17 = arith.addf %15, %16 : vector<1x1xf32>
    %cst_7 = arith.constant 9.99999996E-13 : f32
    %18 = vector.broadcast %cst_7 : f32 to vector<1x1xf32>
    %19 = arith.maximumf %17, %18 : vector<1x1xf32>
    %20 = vector.broadcast %19 : vector<1x1xf32> to vector<3x128xf32>
    %21 = arith.divf %7, %20 : vector<3x128xf32>
    %cst_8 = arith.constant 5.000000e-01 : f32
    %22 = vector.broadcast %cst_8 : f32 to vector<3x128xf32>
    %23 = arith.addf %21, %22 : vector<3x128xf32>
    %cst_9 = arith.constant 8.000000e+00 : f32
    %24 = vector.broadcast %cst_9 : f32 to vector<3x128xf32>
    %25 = arith.mulf %23, %24 : vector<3x128xf32>
    %cst_10 = arith.constant 0.000000e+00 : f32
    %cst_11 = arith.constant 7.000000e+00 : f32
    %26 = vector.broadcast %cst_10 : f32 to vector<3x128xf32>
    %27 = arith.maximumf %26, %25 : vector<3x128xf32>
    %28 = vector.broadcast %cst_11 : f32 to vector<3x128xf32>
    %29 = arith.minimumf %28, %27 : vector<3x128xf32>
    %c0_12 = arith.constant 0 : index
    %c0_13 = arith.constant 0 : index
    %c0_14 = arith.constant 0 : index
    %30 = vector.load %arg3[%c0_12, %c0_13, %c0_14] : memref<1x3x128xf32, #tpu.memory_space<vmem>>, vector<1x3x128xf32>
    %31 = vector.shape_cast %30 : vector<1x3x128xf32> to vector<3x128xf32>
    %32 = vector.shape_cast %29 : vector<3x128xf32> to vector<1x3x128xf32>
    tpu.vector_store %arg3[%c0_12, %c0_13, %c0_14], %32 {strides = array<i32>} : memref<1x3x128xf32, #tpu.memory_space<vmem>>, vector<1x3x128xf32>,
    %c0_15 = arith.constant 0 : index
    %c0_16 = arith.constant 0 : index
    %c0_17 = arith.constant 0 : index
    %33 = vector.load %arg2[%c0_15, %c0_16, %c0_17] : memref<1x3x128xf32, #tpu.memory_space<vmem>>, vector<1x3x128xf32>
    %34 = vector.shape_cast %33 : vector<1x3x128xf32> to vector<3x128xf32>
    %cst_18 = arith.constant dense<0.000000e+00> : vector<3xf32>
    %35 = vector.multi_reduction <add>, %34, %cst_18 [1] : vector<3x128xf32> to vector<3xf32>
    %36 = vector.shape_cast %35 : vector<3xf32> to vector<3x1xf32>
    %cst_19 = arith.constant 1.280000e+02 : f32
    %37 = vector.broadcast %cst_19 : f32 to vector<3x1xf32>
    %38 = arith.divf %36, %37 : vector<3x1xf32>
    %39 = vector.broadcast %38 : vector<3x1xf32> to vector<3x128xf32>
    %40 = arith.subf %34, %39 : vector<3x128xf32>
    %41 = arith.mulf %40, %40 : vector<3x128xf32>
    %cst_20 = arith.constant dense<0.000000e+00> : vector<128xf32>
    %42 = vector.multi_reduction <add>, %41, %cst_20 [0] : vector<3x128xf32> to vector<128xf32>
    %43 = vector.shape_cast %42 : vector<128xf32> to vector<1x128xf32>
    %44 = math.sqrt %43 : vector<1x128xf32>
    %cst_21 = arith.constant dense<0xFF800000> : vector<1xf32>
    %45 = vector.multi_reduction <maximumf>, %44, %cst_21 [1] : vector<1x128xf32> to vector<1xf32>
    %46 = vector.shape_cast %45 : vector<1xf32> to vector<1x1xf32>
    %cst_22 = arith.constant 2.000000e+00 : f32
    %47 = vector.broadcast %cst_22 : f32 to vector<1x1xf32>
    %48 = arith.mulf %46, %47 : vector<1x1xf32>
    %cst_23 = arith.constant 0.000000e+00 : f32
    %49 = vector.broadcast %cst_23 : f32 to vector<1x1xf32>
    %50 = arith.addf %48, %49 : vector<1x1xf32>
    %cst_24 = arith.constant 9.99999996E-13 : f32
    %51 = vector.broadcast %cst_24 : f32 to vector<1x1xf32>
    %52 = arith.maximumf %50, %51 : vector<1x1xf32>
    %53 = vector.broadcast %52 : vector<1x1xf32> to vector<3x128xf32>
    %54 = arith.divf %40, %53 : vector<3x128xf32>
    %cst_25 = arith.constant 5.000000e-01 : f32
    %55 = vector.broadcast %cst_25 : f32 to vector<3x128xf32>
    %56 = arith.addf %54, %55 : vector<3x128xf32>
    %cst_26 = arith.constant 8.000000e+00 : f32
    %57 = vector.broadcast %cst_26 : f32 to vector<3x128xf32>
    %58 = arith.mulf %56, %57 : vector<3x128xf32>
    %cst_27 = arith.constant 0.000000e+00 : f32
    %cst_28 = arith.constant 7.000000e+00 : f32
    %59 = vector.broadcast %cst_27 : f32 to vector<3x128xf32>
    %60 = arith.maximumf %59, %58 : vector<3x128xf32>
    %61 = vector.broadcast %cst_28 : f32 to vector<3x128xf32>
    %62 = arith.minimumf %61, %60 : vector<3x128xf32>
    %63 = math.roundeven %62 : vector<3x128xf32>
    %64 = arith.fptosi %63 : vector<3x128xf32> to vector<3x128xi32>
    %65 = vector.extract_strided_slice %64 {offsets = [0, 0], sizes = [1, 128], strides = [1, 1]} : vector<3x128xi32> to vector<1x128xi32>
    %c64_i32 = arith.constant 64 : i32
    %66 = vector.broadcast %c64_i32 : i32 to vector<1x128xi32>
    %67 = arith.muli %65, %66 : vector<1x128xi32>
    %68 = vector.extract_strided_slice %64 {offsets = [1, 0], sizes = [1, 128], strides = [1, 1]} : vector<3x128xi32> to vector<1x128xi32>
    %c8_i32 = arith.constant 8 : i32
    %69 = vector.broadcast %c8_i32 : i32 to vector<1x128xi32>
    %70 = arith.muli %68, %69 : vector<1x128xi32>
    %71 = arith.addi %67, %70 : vector<1x128xi32>
    %72 = vector.extract_strided_slice %64 {offsets = [2, 0], sizes = [1, 128], strides = [1, 1]} : vector<3x128xi32> to vector<1x128xi32>
    %73 = arith.addi %71, %72 : vector<1x128xi32>
    %c0_29 = arith.constant 0 : index
    %c0_30 = arith.constant 0 : index
    %c0_31 = arith.constant 0 : index
    %74 = vector.load %arg4[%c0_29, %c0_30, %c0_31] : memref<1x1x128xi32, #tpu.memory_space<vmem>>, vector<1x1x128xi32>
    %75 = vector.shape_cast %74 : vector<1x1x128xi32> to vector<1x128xi32>
    %76 = vector.shape_cast %73 : vector<1x128xi32> to vector<1x1x128xi32>
    tpu.vector_store %arg4[%c0_29, %c0_30, %c0_31], %76 {strides = array<i32>} : memref<1x1x128xi32, #tpu.memory_space<vmem>>, vector<1x1x128xi32>,
    return
  }
  func.func @transform_0(%arg0: i32) -> (i32, i32, i32) {
    %c0_i32 = arith.constant 0 : i32
    %c0_i32_0 = arith.constant 0 : i32
    %c0_i32_1 = arith.constant 0 : i32
    return %arg0, %c0_i32, %c0_i32_0 : i32, i32, i32
  }
  func.func @transform_1(%arg0: i32) -> (i32, i32, i32) {
    %c0_i32 = arith.constant 0 : i32
    %c0_i32_0 = arith.constant 0 : i32
    %c0_i32_1 = arith.constant 0 : i32
    return %arg0, %c0_i32, %c0_i32_0 : i32, i32, i32
  }
  func.func @transform_2(%arg0: i32) -> (i32, i32, i32) {
    %c0_i32 = arith.constant 0 : i32
    %c0_i32_0 = arith.constant 0 : i32
    %c0_i32_1 = arith.constant 0 : i32
    return %arg0, %c0_i32, %c0_i32_0 : i32, i32, i32
  }
  func.func @transform_3(%arg0: i32) -> (i32, i32, i32) {
    %c0_i32 = arith.constant 0 : i32
    %c0_i32_0 = arith.constant 0 : i32
    %c0_i32_1 = arith.constant 0 : i32
    return %arg0, %c0_i32, %c0_i32_0 : i32, i32, i32
  }
}

</mosaic_0001>

<llo_original>
// kernel: feature_voxel_concatenation.3
$region0: #{feature_voxel_concatenation.3}
  #allocation0 [shape = 'u32[]', space=smem, size = 0x4, offset = 0x4, fixed_abs, tag = 'smem constant byte address 0x4 - core index']
  #allocation1 [shape = 'u32[144,128]{1,0:T(1,128)}', space=vmem, size = 0x12000, scoped, tag = 'internal scratch']
  %s0 = inlined_call_operand.vmem [shape: f32[2,3,128], index: 0, kind: input, shape index: {}]
  %s1 = inlined_call_operand.vmem [shape: f32[2,3,128], index: 1, kind: input, shape index: {}]
  %s2 = inlined_call_operand.vmem [shape: f32[2,3,128], index: 2, kind: output, shape index: {0}]
  %s3 = inlined_call_operand.vmem [shape: s32[2,1,128], index: 3, kind: output, shape index: {1}]
  %4 = xla_tuple %s2, %s3
  %s5 = sld [smem:[#allocation0]]
  $region49: #{feature_voxel_concatenation.3} parent=0
    _
  %s7 = ssub.s32 1, %s5
  %s8 = scalar_select 0, %s7, %s5
  loop: start=0, step=1, limit=4
  $region2: #{feature_voxel_concatenation.3} parent=0 // loop_pre_header
    _
  $region3: #{feature_voxel_concatenation.3} parent=0 // loop_header
    %s10 = sphi 0, %s14
    %p11 = scmp.ge.s32.totalorder %s10, 4
    %s20 = sphi 0, %s22
    %s23 = sphi 0, %s20
    %s24 = sphi 0, %s23
    %s40 = sphi 0, %s24
    %s46 = sphi 0, %s48
    %s49 = sphi 0, %s46
    %s50 = sphi 0, %s49
    %s66 = sphi 0, %s50
    %s72 = sphi 0, %s74
    %s75 = sphi 0, %s72
    %s76 = sphi 0, %s75
    %s92 = sphi 0, %s76
    %s98 = sphi 0, %s100
    %s101 = sphi 0, %s98
    %s102 = sphi 0, %s101
    %s118 = sphi 0, %s102
  $region4: #{feature_voxel_concatenation.3} parent=0 // loop_header_branch
    %13 = sbr.rel (%p11) target = $region8
  $region5: #{feature_voxel_concatenation.3} parent=0 // loop_body
    %s15 = ssub.s32 %s10, 1
    %s16 = ssub.s32 %s10, 2
    %s17 = sadd.s32 %s10, 1
    %s18 = ssub.s32 %s10, %s17
    %p19 = scmp.eq.s32.totalorder %s18, 0
    %s21 = sadd.s32 %s20, 1
    %s22 = scalar_select %p19, %s20, %s21
    %p25 = pneg %p19
    %p26 = scmp.eq.s32.totalorder %s10, 1
    %p27 = por %p25, %p26
    %p28 = scmp.ne.s32.totalorder %s20, %s23
    %p29 = scmp.eq.s32.totalorder %s10, 0
    %p30 = por %p28, %p29
    %p31 = scmp.ne.s32.totalorder %s20, %s23
    %p32 = scmp.eq.s32.totalorder %s15, 1
    %p33 = por %p31, %p32
    %p34 = scmp.ne.s32.totalorder %s23, %s24
    %p35 = scmp.eq.s32.totalorder %s15, 0
    %p36 = por %p34, %p35
    %p37 = scmp.ne.s32.totalorder %s23, %s24
    %p38 = scmp.eq.s32.totalorder %s16, 1
    %p39 = por %p37, %p38
    %p41 = scmp.ne.s32.totalorder %s24, %s40
    %p42 = scmp.eq.s32.totalorder %s16, 0
    %p43 = por %p41, %p42
    %s44 = ssub.s32 %s10, %s17
    %p45 = scmp.eq.s32.totalorder %s44, 0
    %s47 = sadd.s32 %s46, 1
    %s48 = scalar_select %p45, %s46, %s47
    %p51 = pneg %p45
    %p52 = scmp.eq.s32.totalorder %s10, 1
    %p53 = por %p51, %p52
    %p54 = scmp.ne.s32.totalorder %s46, %s49
    %p55 = scmp.eq.s32.totalorder %s10, 0
    %p56 = por %p54, %p55
    %p57 = scmp.ne.s32.totalorder %s46, %s49
    %p58 = scmp.eq.s32.totalorder %s15, 1
    %p59 = por %p57, %p58
    %p60 = scmp.ne.s32.totalorder %s49, %s50
    %p61 = scmp.eq.s32.totalorder %s15, 0
    %p62 = por %p60, %p61
    %p63 = scmp.ne.s32.totalorder %s49, %s50
    %p64 = scmp.eq.s32.totalorder %s16, 1
    %p65 = por %p63, %p64
    %p67 = scmp.ne.s32.totalorder %s50, %s66
    %p68 = scmp.eq.s32.totalorder %s16, 0
    %p69 = por %p67, %p68
    %s70 = ssub.s32 %s10, %s17
    %p71 = scmp.eq.s32.totalorder %s70, 0
    %s73 = sadd.s32 %s72, 1
    %s74 = scalar_select %p71, %s72, %s73
    %p77 = pneg %p71
    %p78 = scmp.eq.s32.totalorder %s10, 1
    %p79 = por %p77, %p78
    %p80 = scmp.ne.s32.totalorder %s72, %s75
    %p81 = scmp.eq.s32.totalorder %s10, 0
    %p82 = por %p80, %p81
    %p83 = scmp.ne.s32.totalorder %s72, %s75
    %p84 = scmp.eq.s32.totalorder %s15, 1
    %p85 = por %p83, %p84
    %p86 = scmp.ne.s32.totalorder %s75, %s76
    %p87 = scmp.eq.s32.totalorder %s15, 0
    %p88 = por %p86, %p87
    %p89 = scmp.ne.s32.totalorder %s75, %s76
    %p90 = scmp.eq.s32.totalorder %s16, 1
    %p91 = por %p89, %p90
    %p93 = scmp.ne.s32.totalorder %s76, %s92
    %p94 = scmp.eq.s32.totalorder %s16, 0
    %p95 = por %p93, %p94
    %s96 = ssub.s32 %s10, %s17
    %p97 = scmp.eq.s32.totalorder %s96, 0
    %s99 = sadd.s32 %s98, 1
    %s100 = scalar_select %p97, %s98, %s99
    %p103 = pneg %p97
    %p104 = scmp.eq.s32.totalorder %s10, 1
    %p105 = por %p103, %p104
    %p106 = scmp.ne.s32.totalorder %s98, %s101
    %p107 = scmp.eq.s32.totalorder %s10, 0
    %p108 = por %p106, %p107
    %p109 = scmp.ne.s32.totalorder %s98, %s101
    %p110 = scmp.eq.s32.totalorder %s15, 1
    %p111 = por %p109, %p110
    %p112 = scmp.ne.s32.totalorder %s101, %s102
    %p113 = scmp.eq.s32.totalorder %s15, 0
    %p114 = por %p112, %p113
    %p115 = scmp.ne.s32.totalorder %s101, %s102
    %p116 = scmp.eq.s32.totalorder %s16, 1
    %p117 = por %p115, %p116
    %p119 = scmp.ne.s32.totalorder %s102, %s118
    %p120 = scmp.eq.s32.totalorder %s16, 0
    %p121 = por %p119, %p120
    %p122 = scmp.le.s32.totalorder 1, %s10
    %p123 = scmp.lt.s32.totalorder %s10, 3
    %p124 = pnand %p122, %p123
    %p125 = pneg %p124
    // Predicated region
    $region9: #{feature_voxel_concatenation.3} parent=5 // pred_check
      _
    $region10: #{feature_voxel_concatenation.3} parent=5 // pred_check_branch
      %127 = sbr.rel (%p124) target = $region12
    $region11: #{feature_voxel_concatenation.3} parent=5 // pred_region
      %s128 = ssub.s32 %s10, 1
    $region12: #{feature_voxel_concatenation.3} parent=5 // pred_fallthru
      _
    %p129 = scmp.lt.s32.totalorder %s10, 2
    // Predicated region
    $region13: #{feature_voxel_concatenation.3} parent=5 // pred_check
      %p130 = pneg %p129
    $region14: #{feature_voxel_concatenation.3} parent=5 // pred_check_branch
      %132 = sbr.rel (%p130) target = $region16
    $region15: #{feature_voxel_concatenation.3} parent=5 // pred_region
      // Predicated region
      $region17: #{feature_voxel_concatenation.3} parent=15 // pred_check
        %p133 = pneg %p30
      $region18: #{feature_voxel_concatenation.3} parent=15 // pred_check_branch
        %135 = sbr.rel (%p133) target = $region20
      $region19: #{feature_voxel_concatenation.3} parent=15 // pred_region
        %p136 = scmp.lt.s32.totalorder %s10, 1
        %s137 = scalar_select %p136, %s10, 1
        %s138 = smul.addr %s137, 4
        %s139 = scalar_lea.vmem %s0, %s138
      $region20: #{feature_voxel_concatenation.3} parent=15 // pred_fallthru
        _
      // Predicated region
      $region21: #{feature_voxel_concatenation.3} parent=15 // pred_check
        %p140 = pneg %p56
      $region22: #{feature_voxel_concatenation.3} parent=15 // pred_check_branch
        %142 = sbr.rel (%p140) target = $region24
      $region23: #{feature_voxel_concatenation.3} parent=15 // pred_region
        %p143 = scmp.lt.s32.totalorder %s10, 1
        %s144 = scalar_select %p143, %s10, 1
        %s145 = smul.addr %s144, 4
        %s146 = scalar_lea.vmem %s1, %s145
      $region24: #{feature_voxel_concatenation.3} parent=15 // pred_fallthru
        _
    $region16: #{feature_voxel_concatenation.3} parent=5 // pred_fallthru
      _
    %p147 = scmp.le.s32.totalorder 1, %s10
    %p148 = scmp.lt.s32.totalorder %s10, 3
    %p149 = pnand %p147, %p148
    %p150 = pneg %p149
    // Predicated region
    $region25: #{feature_voxel_concatenation.3} parent=5 // pred_check
      _
    $region26: #{feature_voxel_concatenation.3} parent=5 // pred_check_branch
      %152 = sbr.rel (%p149) target = $region28
    $region27: #{feature_voxel_concatenation.3} parent=5 // pred_region
      %s153 = ssub.s32 %s10, 1
      %p154 = scmp.lt.s32.totalorder %s15, 1
      %s155 = scalar_select %p154, %s15, 1
      %s156 = smul.addr %s155, 4
      %s157 = scalar_lea.vmem %s0, %s156
      %p158 = pneg %p36
      %p159 = pneg %p33
      %p160 = scmp.lt.s32.totalorder %s15, 1
      %s161 = scalar_select %p160, %s15, 1
      %s162 = smul.addr %s161, 4
      %s163 = scalar_lea.vmem %s1, %s162
      %p164 = pneg %p62
      %p165 = pneg %p59
      %p166 = pneg %p88
      %p167 = pneg %p85
      %p168 = scmp.lt.s32.totalorder %s15, 1
      %s169 = scalar_select %p168, %s15, 1
      %s170 = smul.addr %s169, 4
      %s171 = scalar_lea.vmem %s2, %s170
      %p172 = pneg %p114
      %p173 = pneg %p111
      %p174 = scmp.lt.s32.totalorder %s15, 1
      %s175 = scalar_select %p174, %s15, 1
      %s176 = scalar_lea.vmem %s3, %s175
      %p177 = scmp.lt.s32.totalorder %s15, 1
      %s178 = scalar_select %p177, %s15, 1
      %s179 = smul.addr %s178, 4
      %s180 = scalar_lea.vmem %s0, %s179
      %p181 = scmp.lt.s32.totalorder %s15, 1
      %s182 = scalar_select %p181, %s15, 1
      %s183 = smul.addr %s182, 4
      %s184 = scalar_lea.vmem %s1, %s183
      %p185 = scmp.lt.s32.totalorder %s15, 1
      %s186 = scalar_select %p185, %s15, 1
      %s187 = smul.addr %s186, 4
      %s188 = scalar_lea.vmem %s2, %s187
      %p189 = scmp.lt.s32.totalorder %s15, 1
      %s190 = scalar_select %p189, %s15, 1
      %s191 = scalar_lea.vmem %s3, %s190
      %v192 = vld [vmem:[%s180] sm:$0x7]
      %vm193 = vcmask 1042432
      %v194 = vsel %vm193, %v192, 0.0
      %195 = vadd.xlane.f32.xlu0 %v194
      %v196 = vpop.xlane.xlu0 %195
      %v197 = vrcp.pop 128.0
      %v198 = vmul.f32 %v196, %v197
      %v199 = vsub.f32 %v192, %v198
      %v200 = vmul.f32 %v199, %v199
      %v201 = vsel %vm193, %v200, 0.0
      %v202 = vrot.slane %v201, 4
      %v203 = vadd.f32 %v201, %v202
      %v204 = vrot.slane %v203, 2
      %v205 = vadd.f32 %v203, %v204
      %v206 = vrot.slane %v205, 1
      %v207 = vadd.f32 %v205, %v206
      %v208 = vrsqrt.pop %v207
      %v209 = vmul.f32 %v207, %v208
      %vm210 = vcmp.eq.f32.partialorder %v207, inf
      %v211 = vsel %vm210, %v207, %v209
      %vm212 = vcmp.eq.f32.partialorder %v207, 0.0
      %v213 = vand.u32 %v207, 2147483648
      %v214 = vsel %vm212, %v213, %v211
      %215 = vmax.xlane.f32.xlu0 %v214
      %v216 = vpop.xlane.xlu0 %215
      %v217 = vmul.f32 %v216, 2.0
      %v218 = vadd.f32 %v217, 0.0
      %v219 = vmax.f32 %v218, 1e-12
      %v220 = vrcp.pop %v219
      %v221 = vmul.f32 %v199, %v220
      %v222 = vadd.f32 %v221, 0.5
      %v223 = vmul.f32 %v222, 8.0
      %v224 = vmax.f32 %v223, 0.0
      %v225 = vmin.f32 %v224, 7.0
      %226 = vst [vmem:[%s188] sm:$0x7] %v225
      %v227 = vld [vmem:[%s184] sm:$0x7]
      %v228 = vsel %vm193, %v227, 0.0
      %229 = vadd.xlane.f32.xlu0 %v228
      %v230 = vpop.xlane.xlu0 %229
      %v231 = vmul.f32 %v230, %v197
      %v232 = vsub.f32 %v227, %v231
      %v233 = vmul.f32 %v232, %v232
      %v234 = vsel %vm193, %v233, 0.0
      %v235 = vrot.slane %v234, 4
      %v236 = vadd.f32 %v234, %v235
      %v237 = vrot.slane %v236, 2
      %v238 = vadd.f32 %v236, %v237
      %v239 = vrot.slane %v238, 1
      %v240 = vadd.f32 %v238, %v239
      %v241 = vrsqrt.pop %v240
      %v242 = vmul.f32 %v240, %v241
      %vm243 = vcmp.eq.f32.partialorder %v240, inf
      %v244 = vsel %vm243, %v240, %v242
      %vm245 = vcmp.eq.f32.partialorder %v240, 0.0
      %v246 = vand.u32 %v240, 2147483648
      %v247 = vsel %vm245, %v246, %v244
      %248 = vmax.xlane.f32.xlu0 %v247
      %v249 = vpop.xlane.xlu0 %248
      %v250 = vmul.f32 %v249, 2.0
      %v251 = vadd.f32 %v250, 0.0
      %v252 = vmax.f32 %v251, 1e-12
      %v253 = vrcp.pop %v252
      %v254 = vmul.f32 %v232, %v253
      %v255 = vadd.f32 %v254, 0.5
      %v256 = vmul.f32 %v255, 8.0
      %v257 = vmax.f32 %v256, 0.0
      %v258 = vmin.f32 %v257, 7.0
      %v259 = vcvt.f32.s32.ties.to.even %v258
      %v260 = vmul.u32 %v259, 64
      %v261 = vmul.u32 %v259, 8
      %v262 = vrot.slane %v261, 1
      %v263 = vadd.s32 %v260, %v262
      %v264 = vrot.slane %v259, 2
      %v265 = vadd.s32 %v263, %v264
      %266 = vst [vmem:[%s191] sm:$0x1] %v265
      %p267 = scmp.lt.s32.totalorder %s15, 1
      %s268 = scalar_select %p267, %s15, 1
      %s269 = smul.addr %s268, 4
      %s270 = scalar_lea.vmem %s2, %s269
      %p271 = scmp.lt.s32.totalorder %s15, 1
      %s272 = scalar_select %p271, %s15, 1
      %s273 = scalar_lea.vmem %s3, %s272
      // Predicated region
      $region29: #{feature_voxel_concatenation.3} parent=27 // pred_check
        %p274 = pneg %p85
      $region30: #{feature_voxel_concatenation.3} parent=27 // pred_check_branch
        %276 = sbr.rel (%p274) target = $region32
      $region31: #{feature_voxel_concatenation.3} parent=27 // pred_region
        _
      $region32: #{feature_voxel_concatenation.3} parent=27 // pred_fallthru
        _
      // Predicated region
      $region33: #{feature_voxel_concatenation.3} parent=27 // pred_check
        %p277 = pneg %p111
      $region34: #{feature_voxel_concatenation.3} parent=27 // pred_check_branch
        %279 = sbr.rel (%p277) target = $region36
      $region35: #{feature_voxel_concatenation.3} parent=27 // pred_region
        _
      $region36: #{feature_voxel_concatenation.3} parent=27 // pred_fallthru
        _
    $region28: #{feature_voxel_concatenation.3} parent=5 // pred_fallthru
      _
    %p280 = scmp.le.s32.totalorder 2, %s10
    // Predicated region
    $region37: #{feature_voxel_concatenation.3} parent=5 // pred_check
      %p281 = pneg %p280
    $region38: #{feature_voxel_concatenation.3} parent=5 // pred_check_branch
      %283 = sbr.rel (%p281) target = $region40
    $region39: #{feature_voxel_concatenation.3} parent=5 // pred_region
      %s284 = ssub.s32 %s10, 2
      // Predicated region
      $region41: #{feature_voxel_concatenation.3} parent=39 // pred_check
        %p285 = pneg %p91
      $region42: #{feature_voxel_concatenation.3} parent=39 // pred_check_branch
        %287 = sbr.rel (%p285) target = $region44
      $region43: #{feature_voxel_concatenation.3} parent=39 // pred_region
        %p288 = scmp.lt.s32.totalorder %s16, 1
        %s289 = scalar_select %p288, %s16, 1
        %s290 = smul.addr %s289, 4
        %s291 = scalar_lea.vmem %s2, %s290
      $region44: #{feature_voxel_concatenation.3} parent=39 // pred_fallthru
        _
      // Predicated region
      $region45: #{feature_voxel_concatenation.3} parent=39 // pred_check
        %p292 = pneg %p117
      $region46: #{feature_voxel_concatenation.3} parent=39 // pred_check_branch
        %294 = sbr.rel (%p292) target = $region48
      $region47: #{feature_voxel_concatenation.3} parent=39 // pred_region
        %p295 = scmp.lt.s32.totalorder %s16, 1
        %s296 = scalar_select %p295, %s16, 1
        %s297 = scalar_lea.vmem %s3, %s296
      $region48: #{feature_voxel_concatenation.3} parent=39 // pred_fallthru
        _
    $region40: #{feature_voxel_concatenation.3} parent=5 // pred_fallthru
      _
  $region6: #{feature_voxel_concatenation.3} parent=0 // loop_footer
    %s14 = sadd.s32 1, %s10
  $region7: #{feature_voxel_concatenation.3} parent=0 // loop_footer_branch
    %9 = sbr.rel target = $region3
  $region8: #{feature_voxel_concatenation.3} parent=0 // loop_exit
    _

// kernel: feature_voxel_concatenation.4
$region0: #{feature_voxel_concatenation.4}
  #allocation0 [shape = 'u32[]', space=smem, size = 0x4, offset = 0x4, fixed_abs, tag = 'smem constant byte address 0x4 - core index']
  #allocation1 [shape = 'u32[144,128]{1,0:T(1,128)}', space=vmem, size = 0x12000, scoped, tag = 'internal scratch']
  #allocation2 [shape = 'f32[9,256]{1,0:T(8,128)}', space=vmem, size = 0x4000, scoped, tag = 'scratch operand']
  %s0 = inlined_call_operand.vmem [shape: f32[2,8,128], index: 0, kind: input, shape index: {}]
  %s1 = inlined_call_operand.vmem [shape: s32[2,1,128], index: 1, kind: input, shape index: {}]
  %s2 = inlined_call_operand.vmem [shape: f32[2,8,512], index: 2, kind: output, shape index: {}]
  %s3 = sld [smem:[#allocation0]]
  $region49: #{feature_voxel_concatenation.4} parent=0
    _
  %s5 = ssub.s32 1, %s3
  %s6 = scalar_select 0, %s5, %s3
  loop: start=0, step=1, limit=6
  $region2: #{feature_voxel_concatenation.4} parent=0 // loop_pre_header
    _
  $region3: #{feature_voxel_concatenation.4} parent=0 // loop_header
    %s8 = sphi 0, %s12
    %p9 = scmp.ge.s32.totalorder %s8, 6
    %s15 = sphi 0, %s34
    %s16 = sphi 0, %s30
    %s17 = sphi 0, %s26
    %s18 = sphi 0, %s15
    %s19 = sphi 0, %s16
    %s20 = sphi 0, %s17
    %s21 = sphi 0, %s18
    %s22 = sphi 0, %s19
    %s23 = sphi 0, %s20
    %s39 = sphi 0, %s41
    %s42 = sphi 0, %s39
    %s43 = sphi 0, %s42
    %s59 = sphi 0, %s43
    %s67 = sphi 0, %s69
    %s70 = sphi 0, %s67
    %s71 = sphi 0, %s70
    %s87 = sphi 0, %s71
    %s95 = sphi 0, %s97
    %s98 = sphi 0, %s95
    %s99 = sphi 0, %s98
    %s115 = sphi 0, %s99
  $region4: #{feature_voxel_concatenation.4} parent=0 // loop_header_branch
    %11 = sbr.rel (%p9) target = $region8
  $region5: #{feature_voxel_concatenation.4} parent=0 // loop_body
    %s13 = ssub.s32 %s8, 1
    %s14 = ssub.s32 %s8, 2
    %s24 = sadd.s32 1, %s17
    %p25 = scmp.ge.s32.totalorder %s24, 1
    %s26 = scalar_select %p25, 0, %s24
    %s27 = sadd.s32 1, %s16
    %s28 = scalar_select %p25, %s27, %s16
    %p29 = scmp.ge.s32.totalorder %s28, 2
    %s30 = scalar_select %p29, 0, %s28
    %s31 = sadd.s32 1, %s15
    %s32 = scalar_select %p29, %s31, %s15
    %p33 = scmp.ge.s32.totalorder %s32, 2
    %s34 = scalar_select %p33, 0, %s32
    %s35 = ssub.s32 %s15, %s34
    %s36 = ssub.s32 %s17, %s26
    %s37 = sor.u32 %s35, %s36
    %p38 = scmp.eq.s32.totalorder %s37, 0
    %s40 = sadd.s32 %s39, 1
    %s41 = scalar_select %p38, %s39, %s40
    %p44 = pneg %p38
    %p45 = scmp.eq.s32.totalorder %s8, 3
    %p46 = por %p44, %p45
    %p47 = scmp.ne.s32.totalorder %s39, %s42
    %p48 = scmp.eq.s32.totalorder %s8, 0
    %p49 = por %p47, %p48
    %p50 = scmp.ne.s32.totalorder %s39, %s42
    %p51 = scmp.eq.s32.totalorder %s13, 3
    %p52 = por %p50, %p51
    %p53 = scmp.ne.s32.totalorder %s42, %s43
    %p54 = scmp.eq.s32.totalorder %s13, 0
    %p55 = por %p53, %p54
    %p56 = scmp.ne.s32.totalorder %s42, %s43
    %p57 = scmp.eq.s32.totalorder %s14, 3
    %p58 = por %p56, %p57
    %p60 = scmp.ne.s32.totalorder %s43, %s59
    %p61 = scmp.eq.s32.totalorder %s14, 0
    %p62 = por %p60, %p61
    %s63 = ssub.s32 %s15, %s34
    %s64 = ssub.s32 %s17, %s26
    %s65 = sor.u32 %s63, %s64
    %p66 = scmp.eq.s32.totalorder %s65, 0
    %s68 = sadd.s32 %s67, 1
    %s69 = scalar_select %p66, %s67, %s68
    %p72 = pneg %p66
    %p73 = scmp.eq.s32.totalorder %s8, 3
    %p74 = por %p72, %p73
    %p75 = scmp.ne.s32.totalorder %s67, %s70
    %p76 = scmp.eq.s32.totalorder %s8, 0
    %p77 = por %p75, %p76
    %p78 = scmp.ne.s32.totalorder %s67, %s70
    %p79 = scmp.eq.s32.totalorder %s13, 3
    %p80 = por %p78, %p79
    %p81 = scmp.ne.s32.totalorder %s70, %s71
    %p82 = scmp.eq.s32.totalorder %s13, 0
    %p83 = por %p81, %p82
    %p84 = scmp.ne.s32.totalorder %s70, %s71
    %p85 = scmp.eq.s32.totalorder %s14, 3
    %p86 = por %p84, %p85
    %p88 = scmp.ne.s32.totalorder %s71, %s87
    %p89 = scmp.eq.s32.totalorder %s14, 0
    %p90 = por %p88, %p89
    %s91 = ssub.s32 %s15, %s34
    %s92 = ssub.s32 %s16, %s30
    %s93 = sor.u32 %s91, %s92
    %p94 = scmp.eq.s32.totalorder %s93, 0
    %s96 = sadd.s32 %s95, 1
    %s97 = scalar_select %p94, %s95, %s96
    %p100 = pneg %p94
    %p101 = scmp.eq.s32.totalorder %s8, 3
    %p102 = por %p100, %p101
    %p103 = scmp.ne.s32.totalorder %s95, %s98
    %p104 = scmp.eq.s32.totalorder %s8, 0
    %p105 = por %p103, %p104
    %p106 = scmp.ne.s32.totalorder %s95, %s98
    %p107 = scmp.eq.s32.totalorder %s13, 3
    %p108 = por %p106, %p107
    %p109 = scmp.ne.s32.totalorder %s98, %s99
    %p110 = scmp.eq.s32.totalorder %s13, 0
    %p111 = por %p109, %p110
    %p112 = scmp.ne.s32.totalorder %s98, %s99
    %p113 = scmp.eq.s32.totalorder %s14, 3
    %p114 = por %p112, %p113
    %p116 = scmp.ne.s32.totalorder %s99, %s115
    %p117 = scmp.eq.s32.totalorder %s14, 0
    %p118 = por %p116, %p117
    %p119 = scmp.le.s32.totalorder 1, %s8
    %p120 = scmp.lt.s32.totalorder %s8, 5
    %p121 = pnand %p119, %p120
    %p122 = pneg %p121
    // Predicated region
    $region9: #{feature_voxel_concatenation.4} parent=5 // pred_check
      _
    $region10: #{feature_voxel_concatenation.4} parent=5 // pred_check_branch
      %124 = sbr.rel (%p121) target = $region12
    $region11: #{feature_voxel_concatenation.4} parent=5 // pred_region
      %s125 = ssub.s32 %s8, 1
    $region12: #{feature_voxel_concatenation.4} parent=5 // pred_fallthru
      _
    %p126 = scmp.lt.s32.totalorder %s8, 4
    // Predicated region
    $region13: #{feature_voxel_concatenation.4} parent=5 // pred_check
      %p127 = pneg %p126
    $region14: #{feature_voxel_concatenation.4} parent=5 // pred_check_branch
      %129 = sbr.rel (%p127) target = $region16
    $region15: #{feature_voxel_concatenation.4} parent=5 // pred_region
      // Predicated region
      $region17: #{feature_voxel_concatenation.4} parent=15 // pred_check
        %p130 = pneg %p49
      $region18: #{feature_voxel_concatenation.4} parent=15 // pred_check_branch
        %132 = sbr.rel (%p130) target = $region20
      $region19: #{feature_voxel_concatenation.4} parent=15 // pred_region
        %p133 = scmp.lt.s32.totalorder %s15, 1
        %s134 = scalar_select %p133, %s15, 1
        %p135 = scmp.lt.s32.totalorder %s17, 0
        %s136 = scalar_select %p135, %s17, 0
        %s137 = sadd.s32 %s136, %s134
        %s138 = smul.addr %s137, 8
        %s139 = scalar_lea.vmem %s0, %s138
      $region20: #{feature_voxel_concatenation.4} parent=15 // pred_fallthru
        _
      // Predicated region
      $region21: #{feature_voxel_concatenation.4} parent=15 // pred_check
        %p140 = pneg %p77
      $region22: #{feature_voxel_concatenation.4} parent=15 // pred_check_branch
        %142 = sbr.rel (%p140) target = $region24
      $region23: #{feature_voxel_concatenation.4} parent=15 // pred_region
        %p143 = scmp.lt.s32.totalorder %s15, 1
        %s144 = scalar_select %p143, %s15, 1
        %p145 = scmp.lt.s32.totalorder %s17, 0
        %s146 = scalar_select %p145, %s17, 0
        %s147 = sadd.s32 %s146, %s144
        %s148 = scalar_lea.vmem %s1, %s147
      $region24: #{feature_voxel_concatenation.4} parent=15 // pred_fallthru
        _
    $region16: #{feature_voxel_concatenation.4} parent=5 // pred_fallthru
      _
    %p149 = scmp.le.s32.totalorder 1, %s8
    %p150 = scmp.lt.s32.totalorder %s8, 5
    %p151 = pnand %p149, %p150
    %p152 = pneg %p151
    // Predicated region
    $region25: #{feature_voxel_concatenation.4} parent=5 // pred_check
      _
    $region26: #{feature_voxel_concatenation.4} parent=5 // pred_check_branch
      %154 = sbr.rel (%p151) target = $region28
    $region27: #{feature_voxel_concatenation.4} parent=5 // pred_region
      %s155 = ssub.s32 %s8, 1
      %p156 = scmp.lt.s32.totalorder %s18, 1
      %s157 = scalar_select %p156, %s18, 1
      %p158 = scmp.lt.s32.totalorder %s20, 0
      %s159 = scalar_select %p158, %s20, 0
      %s160 = sadd.s32 %s159, %s157
      %s161 = smul.addr %s160, 8
      %s162 = scalar_lea.vmem %s0, %s161
      %p163 = pneg %p55
      %p164 = pneg %p52
      %p165 = scmp.lt.s32.totalorder %s18, 1
      %s166 = scalar_select %p165, %s18, 1
      %p167 = scmp.lt.s32.totalorder %s20, 0
      %s168 = scalar_select %p167, %s20, 0
      %s169 = sadd.s32 %s168, %s166
      %s170 = scalar_lea.vmem %s1, %s169
      %p171 = pneg %p83
      %p172 = pneg %p80
      %p173 = pneg %p111
      %p174 = pneg %p108
      %s175 = smul.u32 2, %s19
      %p176 = scmp.lt.s32.totalorder %s18, 1
      %s177 = scalar_select %p176, %s18, 1
      %p178 = scmp.lt.s32.totalorder %s175, 3
      %s179 = scalar_select %p178, %s175, 3
      %s180 = smul.addr %s177, 4
      %s181 = sadd.s32 %s179, %s180
      %s182 = smul.addr %s181, 8
      %s183 = scalar_lea.vmem %s2, %s182
      %p184 = scmp.lt.s32.totalorder %s18, 1
      %s185 = scalar_select %p184, %s18, 1
      %p186 = scmp.lt.s32.totalorder %s20, 0
      %s187 = scalar_select %p186, %s20, 0
      %s188 = sadd.s32 %s187, %s185
      %s189 = smul.addr %s188, 8
      %s190 = scalar_lea.vmem %s0, %s189
      %p191 = scmp.lt.s32.totalorder %s18, 1
      %s192 = scalar_select %p191, %s18, 1
      %p193 = scmp.lt.s32.totalorder %s20, 0
      %s194 = scalar_select %p193, %s20, 0
      %s195 = sadd.s32 %s194, %s192
      %s196 = scalar_lea.vmem %s1, %s195
      %s197 = smul.u32 2, %s19
      %p198 = scmp.lt.s32.totalorder %s18, 1
      %s199 = scalar_select %p198, %s18, 1
      %p200 = scmp.lt.s32.totalorder %s197, 3
      %s201 = scalar_select %p200, %s197, 3
      %s202 = smul.addr %s199, 4
      %s203 = sadd.s32 %s201, %s202
      %s204 = smul.addr %s203, 8
      %s205 = scalar_lea.vmem %s2, %s204
      %s206 = smul.u32 2, %s19
      %p207 = scmp.eq.s32.totalorder %s20, 0
      // Predicated region
      $region29: #{feature_voxel_concatenation.4} parent=27 // pred_check
        %p208 = pneg %p207
      $region30: #{feature_voxel_concatenation.4} parent=27 // pred_check_branch
        %210 = sbr.rel (%p208) target = $region32
      $region31: #{feature_voxel_concatenation.4} parent=27 // pred_region
        %211 = vst [vmem:[#allocation2] sm:$0xff] 0.0
        %212 = vst [vmem:[#allocation2 + $0x8] sm:$0xff] 0.0
        %213 = vst [vmem:[#allocation2 + $0x10] sm:$0x1] 0.0
        %214 = vst [vmem:[#allocation2 + $0x18] sm:$0x1] 0.0
      $region32: #{feature_voxel_concatenation.4} parent=27 // pred_fallthru
        _
      %v215 = vld [vmem:[%s190] sm:$0xff]
      %v216 = vld [vmem:[%s196] sm:$0x1]
      %s217 = smul.u32 %s19, 256
      %v218 = vstv %s217
      %v219 = vsub.s32 %v216, %v218
      %v220 = vlaneseq
      %v221 = vshrl.u32 %v220, 7
      %v222 = vadd.s32 %v221, 8
      %v223 = vadd.s32 %v221, 16
      %v224 = vadd.s32 %v221, 24
      %v225 = vadd.s32 %v221, 32
      %v226 = vadd.s32 %v221, 40
      %v227 = vadd.s32 %v221, 48
      %v228 = vadd.s32 %v221, 56
      %v229 = vadd.s32 %v221, 64
      %v230 = vadd.s32 %v221, 72
      %v231 = vadd.s32 %v221, 80
      %v232 = vadd.s32 %v221, 88
      %v233 = vadd.s32 %v221, 96
      %v234 = vadd.s32 %v221, 104
      %v235 = vadd.s32 %v221, 112
      %v236 = vadd.s32 %v221, 120
      %v237 = vadd.s32 %v221, 128
      %v238 = vadd.s32 %v221, 136
      %v239 = vadd.s32 %v221, 144
      %v240 = vadd.s32 %v221, 152
      %v241 = vadd.s32 %v221, 160
      %v242 = vadd.s32 %v221, 168
      %v243 = vadd.s32 %v221, 176
      %v244 = vadd.s32 %v221, 184
      %v245 = vadd.s32 %v221, 192
      %v246 = vadd.s32 %v221, 200
      %v247 = vadd.s32 %v221, 208
      %v248 = vadd.s32 %v221, 216
      %v249 = vadd.s32 %v221, 224
      %v250 = vadd.s32 %v221, 232
      %v251 = vadd.s32 %v221, 240
      %v252 = vadd.s32 %v221, 248
      %v253 = vlaneseq
      %v254 = vshrl.u32 %v253, 7
      %v255 = vsub.s32 0, %v254
      %v256 = vrot.slane %v219, %v255
      %vm257 = vcmp.eq.s32.totalorder %v221, %v256
      %vm258 = vcmp.eq.s32.totalorder %v222, %v256
      %vm259 = vcmp.eq.s32.totalorder %v223, %v256
      %vm260 = vcmp.eq.s32.totalorder %v224, %v256
      %vm261 = vcmp.eq.s32.totalorder %v225, %v256
      %vm262 = vcmp.eq.s32.totalorder %v226, %v256
      %vm263 = vcmp.eq.s32.totalorder %v227, %v256
      %vm264 = vcmp.eq.s32.totalorder %v228, %v256
      %vm265 = vcmp.eq.s32.totalorder %v229, %v256
      %vm266 = vcmp.eq.s32.totalorder %v230, %v256
      %vm267 = vcmp.eq.s32.totalorder %v231, %v256
      %vm268 = vcmp.eq.s32.totalorder %v232, %v256
      %vm269 = vcmp.eq.s32.totalorder %v233, %v256
      %vm270 = vcmp.eq.s32.totalorder %v234, %v256
      %vm271 = vcmp.eq.s32.totalorder %v235, %v256
      %vm272 = vcmp.eq.s32.totalorder %v236, %v256
      %vm273 = vcmp.eq.s32.totalorder %v237, %v256
      %vm274 = vcmp.eq.s32.totalorder %v238, %v256
      %vm275 = vcmp.eq.s32.totalorder %v239, %v256
      %vm276 = vcmp.eq.s32.totalorder %v240, %v256
      %vm277 = vcmp.eq.s32.totalorder %v241, %v256
      %vm278 = vcmp.eq.s32.totalorder %v242, %v256
      %vm279 = vcmp.eq.s32.totalorder %v243, %v256
      %vm280 = vcmp.eq.s32.totalorder %v244, %v256
      %vm281 = vcmp.eq.s32.totalorder %v245, %v256
      %vm282 = vcmp.eq.s32.totalorder %v246, %v256
      %vm283 = vcmp.eq.s32.totalorder %v247, %v256
      %vm284 = vcmp.eq.s32.totalorder %v248, %v256
      %vm285 = vcmp.eq.s32.totalorder %v249, %v256
      %vm286 = vcmp.eq.s32.totalorder %v250, %v256
      %vm287 = vcmp.eq.s32.totalorder %v251, %v256
      %vm288 = vcmp.eq.s32.totalorder %v252, %v256
      %v289 = vsel %vm257, 1, 0
      %v290 = vsel %vm258, 1, 0
      %v291 = vsel %vm259, 1, 0
      %v292 = vsel %vm260, 1, 0
      %v293 = vsel %vm261, 1, 0
      %v294 = vsel %vm262, 1, 0
      %v295 = vsel %vm263, 1, 0
      %v296 = vsel %vm264, 1, 0
      %v297 = vsel %vm265, 1, 0
      %v298 = vsel %vm266, 1, 0
      %v299 = vsel %vm267, 1, 0
      %v300 = vsel %vm268, 1, 0
      %v301 = vsel %vm269, 1, 0
      %v302 = vsel %vm270, 1, 0
      %v303 = vsel %vm271, 1, 0
      %v304 = vsel %vm272, 1, 0
      %v305 = vsel %vm273, 1, 0
      %v306 = vsel %vm274, 1, 0
      %v307 = vsel %vm275, 1, 0
      %v308 = vsel %vm276, 1, 0
      %v309 = vsel %vm277, 1, 0
      %v310 = vsel %vm278, 1, 0
      %v311 = vsel %vm279, 1, 0
      %v312 = vsel %vm280, 1, 0
      %v313 = vsel %vm281, 1, 0
      %v314 = vsel %vm282, 1, 0
      %v315 = vsel %vm283, 1, 0
      %v316 = vsel %vm284, 1, 0
      %v317 = vsel %vm285, 1, 0
      %v318 = vsel %vm286, 1, 0
      %v319 = vsel %vm287, 1, 0
      %v320 = vsel %vm288, 1, 0
      %v321 = vcvt.s32.f32 %v289
      %v322 = vcvt.s32.f32 %v290
      %v323 = vcvt.s32.f32 %v291
      %v324 = vcvt.s32.f32 %v292
      %v325 = vcvt.s32.f32 %v293
      %v326 = vcvt.s32.f32 %v294
      %v327 = vcvt.s32.f32 %v295
      %v328 = vcvt.s32.f32 %v296
      %v329 = vcvt.s32.f32 %v297
      %v330 = vcvt.s32.f32 %v298
      %v331 = vcvt.s32.f32 %v299
      %v332 = vcvt.s32.f32 %v300
      %v333 = vcvt.s32.f32 %v301
      %v334 = vcvt.s32.f32 %v302
      %v335 = vcvt.s32.f32 %v303
      %v336 = vcvt.s32.f32 %v304
      %v337 = vcvt.s32.f32 %v305
      %v338 = vcvt.s32.f32 %v306
      %v339 = vcvt.s32.f32 %v307
      %v340 = vcvt.s32.f32 %v308
      %v341 = vcvt.s32.f32 %v309
      %v342 = vcvt.s32.f32 %v310
      %v343 = vcvt.s32.f32 %v311
      %v344 = vcvt.s32.f32 %v312
      %v345 = vcvt.s32.f32 %v313
      %v346 = vcvt.s32.f32 %v314
      %v347 = vcvt.s32.f32 %v315
      %v348 = vcvt.s32.f32 %v316
      %v349 = vcvt.s32.f32 %v317
      %v350 = vcvt.s32.f32 %v318
      %v351 = vcvt.s32.f32 %v319
      %v352 = vcvt.s32.f32 %v320
      %v353 = vld [vmem:[#allocation2] sm:$0xff]
      %v354 = vld [vmem:[#allocation2 + $0x8] sm:$0xff]
      %v355 = vld [vmem:[#allocation2 + $0x10] sm:$0x1]
      %v356 = vld [vmem:[#allocation2 + $0x18] sm:$0x1]
      %357 = vmatprep.subr.mxu0 0.0
      %358 = vmatpush1.xpose.msra.mxu0 %v321
      %359 = vmatprep.subr.mxu0 0.0
      %360 = vmatpush1.xpose.msra.mxu0 %v322
      %361 = vmatprep.subr.mxu0 0.0
      %362 = vmatpush1.xpose.msra.mxu0 %v323
      %363 = vmatprep.subr.mxu0 0.0
      %364 = vmatpush1.xpose.msra.mxu0 %v324
      %365 = vmatprep.subr.mxu0 0.0
      %366 = vmatpush1.xpose.msra.mxu0 %v325
      %367 = vmatprep.subr.mxu0 0.0
      %368 = vmatpush1.xpose.msra.mxu0 %v326
      %369 = vmatprep.subr.mxu0 0.0
      %370 = vmatpush1.xpose.msra.mxu0 %v327
      %371 = vmatprep.subr.mxu0 0.0
      %372 = vmatpush1.xpose.msra.mxu0 %v328
      %373 = vmatprep.subr.mxu0 0.0
      %374 = vmatpush1.xpose.msra.mxu0 %v329
      %375 = vmatprep.subr.mxu0 0.0
      %376 = vmatpush1.xpose.msra.mxu0 %v330
      %377 = vmatprep.subr.mxu0 0.0
      %378 = vmatpush1.xpose.msra.mxu0 %v331
      %379 = vmatprep.subr.mxu0 0.0
      %380 = vmatpush1.xpose.msra.mxu0 %v332
      %381 = vmatprep.subr.mxu0 0.0
      %382 = vmatpush1.xpose.msra.mxu0 %v333
      %383 = vmatprep.subr.mxu0 0.0
      %384 = vmatpush1.xpose.msra.mxu0 %v334
      %385 = vmatprep.subr.mxu0 0.0
      %386 = vmatpush1.xpose.msra.mxu0 %v335
      %387 = vmatprep.subr.mxu0 0.0
      %388 = vmatpush1.xpose.msra.mxu0 %v336
      %389 = vmatprep.subr.mxu0 0.0
      %390 = vmatpush1.xpose.msra.mxu0 %v337
      %391 = vmatprep.subr.mxu0 0.0
      %392 = vmatpush1.xpose.msra.mxu0 %v338
      %393 = vmatprep.subr.mxu0 0.0
      %394 = vmatpush1.xpose.msra.mxu0 %v339
      %395 = vmatprep.subr.mxu0 0.0
      %396 = vmatpush1.xpose.msra.mxu0 %v340
      %397 = vmatprep.subr.mxu0 0.0
      %398 = vmatpush1.xpose.msra.mxu0 %v341
      %399 = vmatprep.subr.mxu0 0.0
      %400 = vmatpush1.xpose.msra.mxu0 %v342
      %401 = vmatprep.subr.mxu0 0.0
      %402 = vmatpush1.xpose.msra.mxu0 %v343
      %403 = vmatprep.subr.mxu0 0.0
      %404 = vmatpush1.xpose.msra.mxu0 %v344
      %405 = vmatprep.subr.mxu0 0.0
      %406 = vmatpush1.xpose.msra.mxu0 %v345
      %407 = vmatprep.subr.mxu0 0.0
      %408 = vmatpush1.xpose.msra.mxu0 %v346
      %409 = vmatprep.subr.mxu0 0.0
      %410 = vmatpush1.xpose.msra.mxu0 %v347
      %411 = vmatprep.subr.mxu0 0.0
      %412 = vmatpush1.xpose.msra.mxu0 %v348
      %413 = vmatprep.subr.mxu0 0.0
      %414 = vmatpush1.xpose.msra.mxu0 %v349
      %415 = vmatprep.subr.mxu0 0.0
      %416 = vmatpush1.xpose.msra.mxu0 %v350
      %417 = vmatprep.subr.mxu0 0.0
      %418 = vmatpush1.xpose.msra.mxu0 %v351
      %419 = vmatprep.subr.mxu0 0.0
      %420 = vmatpush1.xpose.msra.mxu0 %v352
      %421 = vmatprep.mubr.f32.mxu0 0.0
      %422 = vmatmul.mubr.f32.gmra.mrb[0].mxu0 %v215
      %v423 = vpop.f32.mrb[0].mxu0
      %v424 = vadd.f32 0.0, %v423
      %v425 = vpop.f32.mrb[0].mxu0
      %v426 = vadd.f32 0.0, %v425
      %427 = vmatprep.mubr.f32.mxu0 0.0
      %428 = vmatmul.mubr.f32.gmra.mrb[0].mxu0 1.0
      %v429 = vpop.f32.mrb[0].mxu0
      %v430 = vadd.f32 0.0, %v429
      %v431 = vpop.f32.mrb[0].mxu0
      %v432 = vadd.f32 0.0, %v431
      %433 = vdwg.mxu0
      %v434 = vadd.f32 %v353, %v424
      %v435 = vadd.f32 %v354, %v426
      %v436 = vadd.f32 %v355, %v430
      %v437 = vadd.f32 %v356, %v432
      %438 = vst [vmem:[#allocation2] sm:$0xff] %v434
      %439 = vst [vmem:[#allocation2 + $0x8] sm:$0xff] %v435
      %440 = vst [vmem:[#allocation2 + $0x10] sm:$0x1] %v436
      %441 = vst [vmem:[#allocation2 + $0x18] sm:$0x1] %v437
      // Predicated region
      $region33: #{feature_voxel_concatenation.4} parent=27 // pred_check
        %p442 = pneg %p207
      $region34: #{feature_voxel_concatenation.4} parent=27 // pred_check_branch
        %444 = sbr.rel (%p442) target = $region36
      $region35: #{feature_voxel_concatenation.4} parent=27 // pred_region
        %s445 = scalar_lea.vmem [#allocation2], 16
        %v446 = vld [vmem:[%s445] ss:$8 sm:$0x3]
        %v447 = vld [vmem:[#allocation2] sm:$0xff]
        %v448 = vld [vmem:[#allocation2 + $0x8] sm:$0xff]
        %v449 = vmax.f32 %v446, 1.0
        %v451 = vlaneseq
        %v452 = vshrl.u32 %v451, 7
        %v453 = vsub.s32 0, %v452
        %v454 = vrot.slane %v449, %v453
        %v455 = vlaneseq
        %v456 = vshrl.u32 %v455, 7
        %v457 = vsub.s32 1, %v456
        %v458 = vrot.slane %v449, %v457
        %v461 = vrcp.pop %v454
        %v462 = vmul.f32 %v447, %v461
        %v463 = vrcp.pop %v458
        %v464 = vmul.f32 %v448, %v463
        %465 = vst [vmem:[%s205] sm:$0xff] %v462
        %466 = vst [vmem:[%s205 + $0x8] sm:$0xff] %v464
      $region36: #{feature_voxel_concatenation.4} parent=27 // pred_fallthru
        _
      %s467 = smul.u32 2, %s19
      %p468 = scmp.lt.s32.totalorder %s18, 1
      %s469 = scalar_select %p468, %s18, 1
      %p470 = scmp.lt.s32.totalorder %s467, 3
      %s471 = scalar_select %p470, %s467, 3
      %s472 = smul.addr %s469, 4
      %s473 = sadd.s32 %s471, %s472
      %s474 = smul.addr %s473, 8
      %s475 = scalar_lea.vmem %s2, %s474
      // Predicated region
      $region37: #{feature_voxel_concatenation.4} parent=27 // pred_check
        %p476 = pneg %p108
      $region38: #{feature_voxel_concatenation.4} parent=27 // pred_check_branch
        %478 = sbr.rel (%p476) target = $region40
      $region39: #{feature_voxel_concatenation.4} parent=27 // pred_region
        %s479 = smul.u32 2, %s19
      $region40: #{feature_voxel_concatenation.4} parent=27 // pred_fallthru
        _
    $region28: #{feature_voxel_concatenation.4} parent=5 // pred_fallthru
      _
    %p480 = scmp.le.s32.totalorder 2, %s8
    // Predicated region
    $region41: #{feature_voxel_concatenation.4} parent=5 // pred_check
      %p481 = pneg %p480
    $region42: #{feature_voxel_concatenation.4} parent=5 // pred_check_branch
      %483 = sbr.rel (%p481) target = $region44
    $region43: #{feature_voxel_concatenation.4} parent=5 // pred_region
      %s484 = ssub.s32 %s8, 2
      // Predicated region
      $region45: #{feature_voxel_concatenation.4} parent=43 // pred_check
        %p485 = pneg %p114
      $region46: #{feature_voxel_concatenation.4} parent=43 // pred_check_branch
        %487 = sbr.rel (%p485) target = $region48
      $region47: #{feature_voxel_concatenation.4} parent=43 // pred_region
        %s488 = smul.u32 2, %s22
        %p489 = scmp.lt.s32.totalorder %s21, 1
        %s490 = scalar_select %p489, %s21, 1
        %p491 = scmp.lt.s32.totalorder %s488, 3
        %s492 = scalar_select %p491, %s488, 3
        %s493 = smul.addr %s490, 4
        %s494 = sadd.s32 %s492, %s493
        %s495 = smul.addr %s494, 8
        %s496 = scalar_lea.vmem %s2, %s495
      $region48: #{feature_voxel_concatenation.4} parent=43 // pred_fallthru
        _
    $region44: #{feature_voxel_concatenation.4} parent=5 // pred_fallthru
      _
  $region6: #{feature_voxel_concatenation.4} parent=0 // loop_footer
    %s12 = sadd.s32 1, %s8
  $region7: #{feature_voxel_concatenation.4} parent=0 // loop_footer_branch
    %7 = sbr.rel target = $region3
  $region8: #{feature_voxel_concatenation.4} parent=0 // loop_exit
    _

// kernel: feature_voxel_concatenation.5
$region0: #{feature_voxel_concatenation.5}
  #allocation0 [shape = 'u32[]', space=smem, size = 0x4, offset = 0x4, fixed_abs, tag = 'smem constant byte address 0x4 - core index']
  #allocation1 [shape = 'u32[144,128]{1,0:T(1,128)}', space=vmem, size = 0x12000, scoped, tag = 'internal scratch']
  %s0 = inlined_call_operand.vmem [shape: f32[2,8,512], index: 0, kind: input, shape index: {}]
  %s1 = inlined_call_operand.vmem [shape: f32[2,3,128], index: 1, kind: input, shape index: {}]
  %s2 = inlined_call_operand.vmem [shape: f32[2,8,128], index: 2, kind: input, shape index: {}]
  %s3 = inlined_call_operand.hbm [shape: f32[2,16,128], index: 3, kind: output, shape index: {}]
  %s4 = sld [smem:[#allocation0]]
  $region45: #{feature_voxel_concatenation.5} parent=0
    _
  %s6 = ssub.s32 1, %s4
  %s7 = scalar_select 0, %s6, %s4
  $region1: #{feature_voxel_concatenation.5} parent=0
    #allocation2 [shape = 'u8[16384]{0}', space=vmem, size = 0x4000, scoped, tag = 'output window, operand 0']
    #allocation3 [shape = 's32[2]{0}', space=sflag, size = 0x8, scoped, tag = 'scoped memory for feature_voxel_concatenation.5']
    %8 = vsyncpa [#allocation3], 0
    %s9 = scalar_lea.sflag [#allocation3], 1
    %10 = vsyncpa %s9, 0
    loop: start=0, step=1, limit=4
    $region2: #{feature_voxel_concatenation.5} parent=1 // loop_pre_header
      _
    $region3: #{feature_voxel_concatenation.5} parent=1 // loop_header
      %s12 = sphi 0, %s16
      %p13 = scmp.ge.s32.totalorder %s12, 4
      %s19 = sphi 0, %s31
      %s20 = sphi 0, %s27
      %s21 = sphi 0, %s19
      %s22 = sphi 0, %s20
      %s23 = sphi 0, %s21
      %s24 = sphi 0, %s22
      %s34 = sphi 0, %s36
      %s37 = sphi 0, %s34
      %s38 = sphi 0, %s37
      %s54 = sphi 0, %s38
      %s62 = sphi 0, %s64
      %s65 = sphi 0, %s62
      %s66 = sphi 0, %s65
      %s82 = sphi 0, %s66
      %s90 = sphi 0, %s92
      %s93 = sphi 0, %s90
      %s94 = sphi 0, %s93
      %s110 = sphi 0, %s94
      %s118 = sphi 0, %s120
      %s121 = sphi 0, %s118
      %s122 = sphi 0, %s121
      %s138 = sphi 0, %s122
    $region4: #{feature_voxel_concatenation.5} parent=1 // loop_header_branch
      %15 = sbr.rel (%p13) target = $region8
    $region5: #{feature_voxel_concatenation.5} parent=1 // loop_body
      %s17 = ssub.s32 %s12, 1
      %s18 = ssub.s32 %s12, 2
      %s25 = sadd.s32 1, %s20
      %p26 = scmp.ge.s32.totalorder %s25, 1
      %s27 = scalar_select %p26, 0, %s25
      %s28 = sadd.s32 1, %s19
      %s29 = scalar_select %p26, %s28, %s19
      %p30 = scmp.ge.s32.totalorder %s29, 2
      %s31 = scalar_select %p30, 0, %s29
      %s32 = ssub.s32 %s19, %s31
      %p33 = scmp.eq.s32.totalorder %s32, 0
      %s35 = sadd.s32 %s34, 1
      %s36 = scalar_select %p33, %s34, %s35
      %p39 = pneg %p33
      %p40 = scmp.eq.s32.totalorder %s12, 1
      %p41 = por %p39, %p40
      %p42 = scmp.ne.s32.totalorder %s34, %s37
      %p43 = scmp.eq.s32.totalorder %s12, 0
      %p44 = por %p42, %p43
      %p45 = scmp.ne.s32.totalorder %s34, %s37
      %p46 = scmp.eq.s32.totalorder %s17, 1
      %p47 = por %p45, %p46
      %p48 = scmp.ne.s32.totalorder %s37, %s38
      %p49 = scmp.eq.s32.totalorder %s17, 0
      %p50 = por %p48, %p49
      %p51 = scmp.ne.s32.totalorder %s37, %s38
      %p52 = scmp.eq.s32.totalorder %s18, 1
      %p53 = por %p51, %p52
      %p55 = scmp.ne.s32.totalorder %s38, %s54
      %p56 = scmp.eq.s32.totalorder %s18, 0
      %p57 = por %p55, %p56
      %s58 = ssub.s32 %s19, %s31
      %s59 = ssub.s32 %s20, %s27
      %s60 = sor.u32 %s58, %s59
      %p61 = scmp.eq.s32.totalorder %s60, 0
      %s63 = sadd.s32 %s62, 1
      %s64 = scalar_select %p61, %s62, %s63
      %p67 = pneg %p61
      %p68 = scmp.eq.s32.totalorder %s12, 1
      %p69 = por %p67, %p68
      %p70 = scmp.ne.s32.totalorder %s62, %s65
      %p71 = scmp.eq.s32.totalorder %s12, 0
      %p72 = por %p70, %p71
      %p73 = scmp.ne.s32.totalorder %s62, %s65
      %p74 = scmp.eq.s32.totalorder %s17, 1
      %p75 = por %p73, %p74
      %p76 = scmp.ne.s32.totalorder %s65, %s66
      %p77 = scmp.eq.s32.totalorder %s17, 0
      %p78 = por %p76, %p77
      %p79 = scmp.ne.s32.totalorder %s65, %s66
      %p80 = scmp.eq.s32.totalorder %s18, 1
      %p81 = por %p79, %p80
      %p83 = scmp.ne.s32.totalorder %s66, %s82
      %p84 = scmp.eq.s32.totalorder %s18, 0
      %p85 = por %p83, %p84
      %s86 = ssub.s32 %s19, %s31
      %s87 = ssub.s32 %s20, %s27
      %s88 = sor.u32 %s86, %s87
      %p89 = scmp.eq.s32.totalorder %s88, 0
      %s91 = sadd.s32 %s90, 1
      %s92 = scalar_select %p89, %s90, %s91
      %p95 = pneg %p89
      %p96 = scmp.eq.s32.totalorder %s12, 1
      %p97 = por %p95, %p96
      %p98 = scmp.ne.s32.totalorder %s90, %s93
      %p99 = scmp.eq.s32.totalorder %s12, 0
      %p100 = por %p98, %p99
      %p101 = scmp.ne.s32.totalorder %s90, %s93
      %p102 = scmp.eq.s32.totalorder %s17, 1
      %p103 = por %p101, %p102
      %p104 = scmp.ne.s32.totalorder %s93, %s94
      %p105 = scmp.eq.s32.totalorder %s17, 0
      %p106 = por %p104, %p105
      %p107 = scmp.ne.s32.totalorder %s93, %s94
      %p108 = scmp.eq.s32.totalorder %s18, 1
      %p109 = por %p107, %p108
      %p111 = scmp.ne.s32.totalorder %s94, %s110
      %p112 = scmp.eq.s32.totalorder %s18, 0
      %p113 = por %p111, %p112
      %s114 = ssub.s32 %s19, %s31
      %s115 = ssub.s32 %s20, %s27
      %s116 = sor.u32 %s114, %s115
      %p117 = scmp.eq.s32.totalorder %s116, 0
      %s119 = sadd.s32 %s118, 1
      %s120 = scalar_select %p117, %s118, %s119
      %p123 = pneg %p117
      %p124 = scmp.eq.s32.totalorder %s12, 1
      %p125 = por %p123, %p124
      %p126 = scmp.ne.s32.totalorder %s118, %s121
      %p127 = scmp.eq.s32.totalorder %s12, 0
      %p128 = por %p126, %p127
      %p129 = scmp.ne.s32.totalorder %s118, %s121
      %p130 = scmp.eq.s32.totalorder %s17, 1
      %p131 = por %p129, %p130
      %p132 = scmp.ne.s32.totalorder %s121, %s122
      %p133 = scmp.eq.s32.totalorder %s17, 0
      %p134 = por %p132, %p133
      %p135 = scmp.ne.s32.totalorder %s121, %s122
      %p136 = scmp.eq.s32.totalorder %s18, 1
      %p137 = por %p135, %p136
      %p139 = scmp.ne.s32.totalorder %s122, %s138
      %p140 = scmp.eq.s32.totalorder %s18, 0
      %p141 = por %p139, %p140
      %p142 = scmp.le.s32.totalorder 1, %s12
      %p143 = scmp.lt.s32.totalorder %s12, 3
      %p144 = pnand %p142, %p143
      %p145 = pneg %p144
      // Predicated region
      $region9: #{feature_voxel_concatenation.5} parent=5 // pred_check
        _
      $region10: #{feature_voxel_concatenation.5} parent=5 // pred_check_branch
        %147 = sbr.rel (%p144) target = $region12
      $region11: #{feature_voxel_concatenation.5} parent=5 // pred_region
        %s148 = ssub.s32 %s12, 1
      $region12: #{feature_voxel_concatenation.5} parent=5 // pred_fallthru
        _
      %p149 = scmp.lt.s32.totalorder %s12, 2
      // Predicated region
      $region13: #{feature_voxel_concatenation.5} parent=5 // pred_check
        %p150 = pneg %p149
      $region14: #{feature_voxel_concatenation.5} parent=5 // pred_check_branch
        %152 = sbr.rel (%p150) target = $region16
      $region15: #{feature_voxel_concatenation.5} parent=5 // pred_region
        // Predicated region
        $region17: #{feature_voxel_concatenation.5} parent=15 // pred_check
          %p153 = pneg %p44
        $region18: #{feature_voxel_concatenation.5} parent=15 // pred_check_branch
          %155 = sbr.rel (%p153) target = $region20
        $region19: #{feature_voxel_concatenation.5} parent=15 // pred_region
          %p156 = scmp.lt.s32.totalorder %s19, 1
          %s157 = scalar_select %p156, %s19, 1
          %s158 = smul.addr %s157, 4
          %s159 = smul.addr %s158, 8
          %s160 = scalar_lea.vmem %s0, %s159
        $region20: #{feature_voxel_concatenation.5} parent=15 // pred_fallthru
          _
        // Predicated region
        $region21: #{feature_voxel_concatenation.5} parent=15 // pred_check
          %p161 = pneg %p72
        $region22: #{feature_voxel_concatenation.5} parent=15 // pred_check_branch
          %163 = sbr.rel (%p161) target = $region24
        $region23: #{feature_voxel_concatenation.5} parent=15 // pred_region
          %p164 = scmp.lt.s32.totalorder %s19, 1
          %s165 = scalar_select %p164, %s19, 1
          %p166 = scmp.lt.s32.totalorder %s20, 0
          %s167 = scalar_select %p166, %s20, 0
          %s168 = sadd.s32 %s167, %s165
          %s169 = smul.addr %s168, 4
          %s170 = scalar_lea.vmem %s1, %s169
        $region24: #{feature_voxel_concatenation.5} parent=15 // pred_fallthru
          _
        // Predicated region
        $region25: #{feature_voxel_concatenation.5} parent=15 // pred_check
          %p171 = pneg %p100
        $region26: #{feature_voxel_concatenation.5} parent=15 // pred_check_branch
          %173 = sbr.rel (%p171) target = $region28
        $region27: #{feature_voxel_concatenation.5} parent=15 // pred_region
          %p174 = scmp.lt.s32.totalorder %s19, 1
          %s175 = scalar_select %p174, %s19, 1
          %p176 = scmp.lt.s32.totalorder %s20, 0
          %s177 = scalar_select %p176, %s20, 0
          %s178 = sadd.s32 %s177, %s175
          %s179 = smul.addr %s178, 8
          %s180 = scalar_lea.vmem %s2, %s179
        $region28: #{feature_voxel_concatenation.5} parent=15 // pred_fallthru
          _
      $region16: #{feature_voxel_concatenation.5} parent=5 // pred_fallthru
        _
      %p181 = scmp.le.s32.totalorder 1, %s12
      %p182 = scmp.lt.s32.totalorder %s12, 3
      %p183 = pnand %p181, %p182
      %p184 = pneg %p183
      // Predicated region
      $region29: #{feature_voxel_concatenation.5} parent=5 // pred_check
        _
      $region30: #{feature_voxel_concatenation.5} parent=5 // pred_check_branch
        %186 = sbr.rel (%p183) target = $region32
      $region31: #{feature_voxel_concatenation.5} parent=5 // pred_region
        %s187 = ssub.s32 %s12, 1
        %p188 = scmp.lt.s32.totalorder %s21, 1
        %s189 = scalar_select %p188, %s21, 1
        %s190 = smul.addr %s189, 4
        %s191 = smul.addr %s190, 8
        %s192 = scalar_lea.vmem %s0, %s191
        %p193 = pneg %p50
        %p194 = pneg %p47
        %p195 = scmp.lt.s32.totalorder %s21, 1
        %s196 = scalar_select %p195, %s21, 1
        %p197 = scmp.lt.s32.totalorder %s22, 0
        %s198 = scalar_select %p197, %s22, 0
        %s199 = sadd.s32 %s198, %s196
        %s200 = smul.addr %s199, 4
        %s201 = scalar_lea.vmem %s1, %s200
        %p202 = pneg %p78
        %p203 = pneg %p75
        %p204 = scmp.lt.s32.totalorder %s21, 1
        %s205 = scalar_select %p204, %s21, 1
        %p206 = scmp.lt.s32.totalorder %s22, 0
        %s207 = scalar_select %p206, %s22, 0
        %s208 = sadd.s32 %s207, %s205
        %s209 = smul.addr %s208, 8
        %s210 = scalar_lea.vmem %s2, %s209
        %p211 = pneg %p106
        %p212 = pneg %p103
        %p213 = pneg %p134
        %p214 = pneg %p131
        %s215 = sand.u32 %s121, 1
        %s216 = scalar_lea.sflag [#allocation3], %s215
        %s217 = sand.u32 %s121, 1
        %s218 = smul.addr %s217, 16
        %s219 = scalar_lea.vmem [#allocation2], %s218
        %p220 = scmp.lt.s32.totalorder %s21, 1
        %s221 = scalar_select %p220, %s21, 1
        %s222 = smul.addr %s221, 4
        %s223 = smul.addr %s222, 8
        %s224 = scalar_lea.vmem %s0, %s223
        %p225 = scmp.lt.s32.totalorder %s21, 1
        %s226 = scalar_select %p225, %s21, 1
        %p227 = scmp.lt.s32.totalorder %s22, 0
        %s228 = scalar_select %p227, %s22, 0
        %s229 = sadd.s32 %s228, %s226
        %s230 = smul.addr %s229, 4
        %s231 = scalar_lea.vmem %s1, %s230
        %p232 = scmp.lt.s32.totalorder %s21, 1
        %s233 = scalar_select %p232, %s21, 1
        %p234 = scmp.lt.s32.totalorder %s22, 0
        %s235 = scalar_select %p234, %s22, 0
        %s236 = sadd.s32 %s235, %s233
        %s237 = smul.addr %s236, 8
        %s238 = scalar_lea.vmem %s2, %s237
        %v239 = vld [vmem:[%s224] sm:$0xff]
        %v240 = vld [vmem:[%s224 + $0x8] sm:$0xff]
        %v241 = vld [vmem:[%s224 + $0x10] sm:$0xff]
        %v242 = vld [vmem:[%s224 + $0x18] sm:$0xff]
        %v243 = vld [vmem:[%s231] sm:$0x7]
        %v244 = vfloor.f32 %v243
        %v245 = vsub.f32 %v243, %v244
        %v246 = vcvt.f32.s32.to.zero.pseudo %v244
        %v247 = vadd.s32 %v246, 1
        %vm248 = vcmp.lt.s32.totalorder %v247, 7
        %v249 = vsel %vm248, %v247, 7
        %v250 = vlaneseq
        %v251 = vshrl.u32 %v250, 7
        %v252 = vlaneseq
        %v253 = vshrl.u32 %v252, 7
        %v254 = vsub.s32 0, %v253
        %v255 = vrot.slane %v246, %v254
        %vm256 = vcmp.eq.s32.totalorder %v251, %v255
        %v257 = vsub.f32 1.0, %v245
        %v258 = vlaneseq
        %v259 = vshrl.u32 %v258, 7
        %v260 = vsub.s32 0, %v259
        %v261 = vrot.slane %v257, %v260
        %v262 = vsel %vm256, %v261, 0.0
        %v263 = vlaneseq
        %v264 = vshrl.u32 %v263, 7
        %v265 = vsub.s32 0, %v264
        %v266 = vrot.slane %v249, %v265
        %vm267 = vcmp.eq.s32.totalorder %v251, %v266
        %v268 = vlaneseq
        %v269 = vshrl.u32 %v268, 7
        %v270 = vsub.s32 0, %v269
        %v271 = vrot.slane %v245, %v270
        %v272 = vsel %vm267, %v271, 0.0
        %v273 = vadd.f32 %v262, %v272
        %v274 = vlaneseq
        %v275 = vshrl.u32 %v274, 7
        %v276 = vsub.s32 1, %v275
        %v277 = vrot.slane %v246, %v276
        %vm278 = vcmp.eq.s32.totalorder %v251, %v277
        %v279 = vlaneseq
        %v280 = vshrl.u32 %v279, 7
        %v281 = vsub.s32 1, %v280
        %v282 = vrot.slane %v257, %v281
        %v283 = vsel %vm278, %v282, 0.0
        %v284 = vlaneseq
        %v285 = vshrl.u32 %v284, 7
        %v286 = vsub.s32 1, %v285
        %v287 = vrot.slane %v249, %v286
        %vm288 = vcmp.eq.s32.totalorder %v251, %v287
        %v289 = vlaneseq
        %v290 = vshrl.u32 %v289, 7
        %v291 = vsub.s32 1, %v290
        %v292 = vrot.slane %v245, %v291
        %v293 = vsel %vm288, %v292, 0.0
        %v294 = vadd.f32 %v283, %v293
        %v295 = vlaneseq
        %v296 = vshrl.u32 %v295, 7
        %v297 = vsub.s32 2, %v296
        %v298 = vrot.slane %v246, %v297
        %vm299 = vcmp.eq.s32.totalorder %v251, %v298
        %v300 = vlaneseq
        %v301 = vshrl.u32 %v300, 7
        %v302 = vsub.s32 2, %v301
        %v303 = vrot.slane %v257, %v302
        %v304 = vsel %vm299, %v303, 0.0
        %v305 = vlaneseq
        %v306 = vshrl.u32 %v305, 7
        %v307 = vsub.s32 2, %v306
        %v308 = vrot.slane %v249, %v307
        %vm309 = vcmp.eq.s32.totalorder %v251, %v308
        %v310 = vlaneseq
        %v311 = vshrl.u32 %v310, 7
        %v312 = vsub.s32 2, %v311
        %v313 = vrot.slane %v245, %v312
        %v314 = vsel %vm309, %v313, 0.0
        %v315 = vadd.f32 %v304, %v314
        %v317 = vcombine.high %v273, %v273
        %v319 = vunpack.c.l.s4 1966171168
        %v320 = vunpack.c.0.s8 %v319
        %v321 = vlaneseq
        %v322 = vshrl.u32 %v321, 7
        %v323 = vsub.s32 %v320, %v322
        %v324 = vrot.slane %v273, %v323
        %v326 = vunpack.c.l.s4 1966171168
        %v327 = vunpack.c.0.s8 %v326
        %v328 = vlaneseq
        %v329 = vshrl.u32 %v328, 7
        %v330 = vsub.s32 %v327, %v329
        %v331 = vrot.slane %v317, %v330
        %v332 = vcombine.high %v324, %v324
        %v333 = vcombine.high %v331, %v331
        %v335 = vunpack.c.l.s4 1966171168
        %v336 = vunpack.c.0.s8 %v335
        %v337 = vlaneseq
        %v338 = vshrl.u32 %v337, 7
        %v339 = vsub.s32 %v336, %v338
        %v340 = vrot.slane %v324, %v339
        %v342 = vunpack.c.l.s4 1966171168
        %v343 = vunpack.c.0.s8 %v342
        %v344 = vlaneseq
        %v345 = vshrl.u32 %v344, 7
        %v346 = vsub.s32 %v343, %v345
        %v347 = vrot.slane %v331, %v346
        %v349 = vunpack.c.l.s4 1966171168
        %v350 = vunpack.c.0.s8 %v349
        %v351 = vlaneseq
        %v352 = vshrl.u32 %v351, 7
        %v353 = vsub.s32 %v350, %v352
        %v354 = vrot.slane %v332, %v353
        %v356 = vunpack.c.l.s4 1966171168
        %v357 = vunpack.c.0.s8 %v356
        %v358 = vlaneseq
        %v359 = vshrl.u32 %v358, 7
        %v360 = vsub.s32 %v357, %v359
        %v361 = vrot.slane %v333, %v360
        %v362 = vcombine.high %v340, %v340
        %v363 = vcombine.high %v347, %v347
        %v364 = vcombine.high %v354, %v354
        %v365 = vcombine.high %v361, %v361
        %v366 = vlaneseq
        %v367 = vshrl.u32 %v366, 7
        %v368 = vsub.s32 0, %v367
        %v369 = vrot.slane %v340, %v368
        %v370 = vlaneseq
        %v371 = vshrl.u32 %v370, 7
        %v372 = vsub.s32 0, %v371
        %v373 = vrot.slane %v354, %v372
        %v374 = vlaneseq
        %v375 = vshrl.u32 %v374, 7
        %v376 = vsub.s32 0, %v375
        %v377 = vrot.slane %v362, %v376
        %v378 = vlaneseq
        %v379 = vshrl.u32 %v378, 7
        %v380 = vsub.s32 0, %v379
        %v381 = vrot.slane %v364, %v380
        %v382 = vlaneseq
        %v383 = vshrl.u32 %v382, 7
        %v384 = vsub.s32 0, %v383
        %v385 = vrot.slane %v347, %v384
        %v386 = vlaneseq
        %v387 = vshrl.u32 %v386, 7
        %v388 = vsub.s32 0, %v387
        %v389 = vrot.slane %v361, %v388
        %v390 = vlaneseq
        %v391 = vshrl.u32 %v390, 7
        %v392 = vsub.s32 0, %v391
        %v393 = vrot.slane %v363, %v392
        %v394 = vlaneseq
        %v395 = vshrl.u32 %v394, 7
        %v396 = vsub.s32 0, %v395
        %v397 = vrot.slane %v365, %v396
        %v406 = vmul.f32 %v369, %v294
        %v407 = vmul.f32 %v373, %v294
        %v408 = vmul.f32 %v377, %v294
        %v409 = vmul.f32 %v381, %v294
        %v410 = vmul.f32 %v385, %v294
        %v411 = vmul.f32 %v389, %v294
        %v412 = vmul.f32 %v393, %v294
        %v413 = vmul.f32 %v397, %v294
        %v422 = vcombine.high %v406, %v406
        %v424 = vunpack.c.l.s4 1966171168
        %v425 = vunpack.c.0.s8 %v424
        %v426 = vlaneseq
        %v427 = vshrl.u32 %v426, 7
        %v428 = vsub.s32 %v425, %v427
        %v429 = vrot.slane %v406, %v428
        %v431 = vunpack.c.l.s4 1966171168
        %v432 = vunpack.c.0.s8 %v431
        %v433 = vlaneseq
        %v434 = vshrl.u32 %v433, 7
        %v435 = vsub.s32 %v432, %v434
        %v436 = vrot.slane %v422, %v435
        %v437 = vcombine.high %v429, %v429
        %v438 = vcombine.high %v436, %v436
        %v440 = vunpack.c.l.s4 1966171168
        %v441 = vunpack.c.0.s8 %v440
        %v442 = vlaneseq
        %v443 = vshrl.u32 %v442, 7
        %v444 = vsub.s32 %v441, %v443
        %v445 = vrot.slane %v429, %v444
        %v447 = vunpack.c.l.s4 1966171168
        %v448 = vunpack.c.0.s8 %v447
        %v449 = vlaneseq
        %v450 = vshrl.u32 %v449, 7
        %v451 = vsub.s32 %v448, %v450
        %v452 = vrot.slane %v436, %v451
        %v454 = vunpack.c.l.s4 1966171168
        %v455 = vunpack.c.0.s8 %v454
        %v456 = vlaneseq
        %v457 = vshrl.u32 %v456, 7
        %v458 = vsub.s32 %v455, %v457
        %v459 = vrot.slane %v437, %v458
        %v461 = vunpack.c.l.s4 1966171168
        %v462 = vunpack.c.0.s8 %v461
        %v463 = vlaneseq
        %v464 = vshrl.u32 %v463, 7
        %v465 = vsub.s32 %v462, %v464
        %v466 = vrot.slane %v438, %v465
        %v467 = vcombine.high %v445, %v445
        %v468 = vcombine.high %v452, %v452
        %v469 = vcombine.high %v459, %v459
        %v470 = vcombine.high %v466, %v466
        %v471 = vcombine.high %v407, %v407
        %v473 = vunpack.c.l.s4 1966171168
        %v474 = vunpack.c.0.s8 %v473
        %v475 = vlaneseq
        %v476 = vshrl.u32 %v475, 7
        %v477 = vsub.s32 %v474, %v476
        %v478 = vrot.slane %v407, %v477
        %v480 = vunpack.c.l.s4 1966171168
        %v481 = vunpack.c.0.s8 %v480
        %v482 = vlaneseq
        %v483 = vshrl.u32 %v482, 7
        %v484 = vsub.s32 %v481, %v483
        %v485 = vrot.slane %v471, %v484
        %v486 = vcombine.high %v478, %v478
        %v487 = vcombine.high %v485, %v485
        %v489 = vunpack.c.l.s4 1966171168
        %v490 = vunpack.c.0.s8 %v489
        %v491 = vlaneseq
        %v492 = vshrl.u32 %v491, 7
        %v493 = vsub.s32 %v490, %v492
        %v494 = vrot.slane %v478, %v493
        %v496 = vunpack.c.l.s4 1966171168
        %v497 = vunpack.c.0.s8 %v496
        %v498 = vlaneseq
        %v499 = vshrl.u32 %v498, 7
        %v500 = vsub.s32 %v497, %v499
        %v501 = vrot.slane %v485, %v500
        %v503 = vunpack.c.l.s4 1966171168
        %v504 = vunpack.c.0.s8 %v503
        %v505 = vlaneseq
        %v506 = vshrl.u32 %v505, 7
        %v507 = vsub.s32 %v504, %v506
        %v508 = vrot.slane %v486, %v507
        %v510 = vunpack.c.l.s4 1966171168
        %v511 = vunpack.c.0.s8 %v510
        %v512 = vlaneseq
        %v513 = vshrl.u32 %v512, 7
        %v514 = vsub.s32 %v511, %v513
        %v515 = vrot.slane %v487, %v514
        %v516 = vcombine.high %v494, %v494
        %v517 = vcombine.high %v501, %v501
        %v518 = vcombine.high %v508, %v508
        %v519 = vcombine.high %v515, %v515
        %v520 = vcombine.high %v408, %v408
        %v522 = vunpack.c.l.s4 1966171168
        %v523 = vunpack.c.0.s8 %v522
        %v524 = vlaneseq
        %v525 = vshrl.u32 %v524, 7
        %v526 = vsub.s32 %v523, %v525
        %v527 = vrot.slane %v408, %v526
        %v529 = vunpack.c.l.s4 1966171168
        %v530 = vunpack.c.0.s8 %v529
        %v531 = vlaneseq
        %v532 = vshrl.u32 %v531, 7
        %v533 = vsub.s32 %v530, %v532
        %v534 = vrot.slane %v520, %v533
        %v535 = vcombine.high %v527, %v527
        %v536 = vcombine.high %v534, %v534
        %v538 = vunpack.c.l.s4 1966171168
        %v539 = vunpack.c.0.s8 %v538
        %v540 = vlaneseq
        %v541 = vshrl.u32 %v540, 7
        %v542 = vsub.s32 %v539, %v541
        %v543 = vrot.slane %v527, %v542
        %v545 = vunpack.c.l.s4 1966171168
        %v546 = vunpack.c.0.s8 %v545
        %v547 = vlaneseq
        %v548 = vshrl.u32 %v547, 7
        %v549 = vsub.s32 %v546, %v548
        %v550 = vrot.slane %v534, %v549
        %v552 = vunpack.c.l.s4 1966171168
        %v553 = vunpack.c.0.s8 %v552
        %v554 = vlaneseq
        %v555 = vshrl.u32 %v554, 7
        %v556 = vsub.s32 %v553, %v555
        %v557 = vrot.slane %v535, %v556
        %v559 = vunpack.c.l.s4 1966171168
        %v560 = vunpack.c.0.s8 %v559
        %v561 = vlaneseq
        %v562 = vshrl.u32 %v561, 7
        %v563 = vsub.s32 %v560, %v562
        %v564 = vrot.slane %v536, %v563
        %v565 = vcombine.high %v543, %v543
        %v566 = vcombine.high %v550, %v550
        %v567 = vcombine.high %v557, %v557
        %v568 = vcombine.high %v564, %v564
        %v569 = vcombine.high %v409, %v409
        %v571 = vunpack.c.l.s4 1966171168
        %v572 = vunpack.c.0.s8 %v571
        %v573 = vlaneseq
        %v574 = vshrl.u32 %v573, 7
        %v575 = vsub.s32 %v572, %v574
        %v576 = vrot.slane %v409, %v575
        %v578 = vunpack.c.l.s4 1966171168
        %v579 = vunpack.c.0.s8 %v578
        %v580 = vlaneseq
        %v581 = vshrl.u32 %v580, 7
        %v582 = vsub.s32 %v579, %v581
        %v583 = vrot.slane %v569, %v582
        %v584 = vcombine.high %v576, %v576
        %v585 = vcombine.high %v583, %v583
        %v587 = vunpack.c.l.s4 1966171168
        %v588 = vunpack.c.0.s8 %v587
        %v589 = vlaneseq
        %v590 = vshrl.u32 %v589, 7
        %v591 = vsub.s32 %v588, %v590
        %v592 = vrot.slane %v576, %v591
        %v594 = vunpack.c.l.s4 1966171168
        %v595 = vunpack.c.0.s8 %v594
        %v596 = vlaneseq
        %v597 = vshrl.u32 %v596, 7
        %v598 = vsub.s32 %v595, %v597
        %v599 = vrot.slane %v583, %v598
        %v601 = vunpack.c.l.s4 1966171168
        %v602 = vunpack.c.0.s8 %v601
        %v603 = vlaneseq
        %v604 = vshrl.u32 %v603, 7
        %v605 = vsub.s32 %v602, %v604
        %v606 = vrot.slane %v584, %v605
        %v608 = vunpack.c.l.s4 1966171168
        %v609 = vunpack.c.0.s8 %v608
        %v610 = vlaneseq
        %v611 = vshrl.u32 %v610, 7
        %v612 = vsub.s32 %v609, %v611
        %v613 = vrot.slane %v585, %v612
        %v614 = vcombine.high %v592, %v592
        %v615 = vcombine.high %v599, %v599
        %v616 = vcombine.high %v606, %v606
        %v617 = vcombine.high %v613, %v613
        %v618 = vcombine.high %v410, %v410
        %v620 = vunpack.c.l.s4 1966171168
        %v621 = vunpack.c.0.s8 %v620
        %v622 = vlaneseq
        %v623 = vshrl.u32 %v622, 7
        %v624 = vsub.s32 %v621, %v623
        %v625 = vrot.slane %v410, %v624
        %v627 = vunpack.c.l.s4 1966171168
        %v628 = vunpack.c.0.s8 %v627
        %v629 = vlaneseq
        %v630 = vshrl.u32 %v629, 7
        %v631 = vsub.s32 %v628, %v630
        %v632 = vrot.slane %v618, %v631
        %v633 = vcombine.high %v625, %v625
        %v634 = vcombine.high %v632, %v632
        %v636 = vunpack.c.l.s4 1966171168
        %v637 = vunpack.c.0.s8 %v636
        %v638 = vlaneseq
        %v639 = vshrl.u32 %v638, 7
        %v640 = vsub.s32 %v637, %v639
        %v641 = vrot.slane %v625, %v640
        %v643 = vunpack.c.l.s4 1966171168
        %v644 = vunpack.c.0.s8 %v643
        %v645 = vlaneseq
        %v646 = vshrl.u32 %v645, 7
        %v647 = vsub.s32 %v644, %v646
        %v648 = vrot.slane %v632, %v647
        %v650 = vunpack.c.l.s4 1966171168
        %v651 = vunpack.c.0.s8 %v650
        %v652 = vlaneseq
        %v653 = vshrl.u32 %v652, 7
        %v654 = vsub.s32 %v651, %v653
        %v655 = vrot.slane %v633, %v654
        %v657 = vunpack.c.l.s4 1966171168
        %v658 = vunpack.c.0.s8 %v657
        %v659 = vlaneseq
        %v660 = vshrl.u32 %v659, 7
        %v661 = vsub.s32 %v658, %v660
        %v662 = vrot.slane %v634, %v661
        %v663 = vcombine.high %v641, %v641
        %v664 = vcombine.high %v648, %v648
        %v665 = vcombine.high %v655, %v655
        %v666 = vcombine.high %v662, %v662
        %v667 = vcombine.high %v411, %v411
        %v669 = vunpack.c.l.s4 1966171168
        %v670 = vunpack.c.0.s8 %v669
        %v671 = vlaneseq
        %v672 = vshrl.u32 %v671, 7
        %v673 = vsub.s32 %v670, %v672
        %v674 = vrot.slane %v411, %v673
        %v676 = vunpack.c.l.s4 1966171168
        %v677 = vunpack.c.0.s8 %v676
        %v678 = vlaneseq
        %v679 = vshrl.u32 %v678, 7
        %v680 = vsub.s32 %v677, %v679
        %v681 = vrot.slane %v667, %v680
        %v682 = vcombine.high %v674, %v674
        %v683 = vcombine.high %v681, %v681
        %v685 = vunpack.c.l.s4 1966171168
        %v686 = vunpack.c.0.s8 %v685
        %v687 = vlaneseq
        %v688 = vshrl.u32 %v687, 7
        %v689 = vsub.s32 %v686, %v688
        %v690 = vrot.slane %v674, %v689
        %v692 = vunpack.c.l.s4 1966171168
        %v693 = vunpack.c.0.s8 %v692
        %v694 = vlaneseq
        %v695 = vshrl.u32 %v694, 7
        %v696 = vsub.s32 %v693, %v695
        %v697 = vrot.slane %v681, %v696
        %v699 = vunpack.c.l.s4 1966171168
        %v700 = vunpack.c.0.s8 %v699
        %v701 = vlaneseq
        %v702 = vshrl.u32 %v701, 7
        %v703 = vsub.s32 %v700, %v702
        %v704 = vrot.slane %v682, %v703
        %v706 = vunpack.c.l.s4 1966171168
        %v707 = vunpack.c.0.s8 %v706
        %v708 = vlaneseq
        %v709 = vshrl.u32 %v708, 7
        %v710 = vsub.s32 %v707, %v709
        %v711 = vrot.slane %v683, %v710
        %v712 = vcombine.high %v690, %v690
        %v713 = vcombine.high %v697, %v697
        %v714 = vcombine.high %v704, %v704
        %v715 = vcombine.high %v711, %v711
        %v716 = vcombine.high %v412, %v412
        %v718 = vunpack.c.l.s4 1966171168
        %v719 = vunpack.c.0.s8 %v718
        %v720 = vlaneseq
        %v721 = vshrl.u32 %v720, 7
        %v722 = vsub.s32 %v719, %v721
        %v723 = vrot.slane %v412, %v722
        %v725 = vunpack.c.l.s4 1966171168
        %v726 = vunpack.c.0.s8 %v725
        %v727 = vlaneseq
        %v728 = vshrl.u32 %v727, 7
        %v729 = vsub.s32 %v726, %v728
        %v730 = vrot.slane %v716, %v729
        %v731 = vcombine.high %v723, %v723
        %v732 = vcombine.high %v730, %v730
        %v734 = vunpack.c.l.s4 1966171168
        %v735 = vunpack.c.0.s8 %v734
        %v736 = vlaneseq
        %v737 = vshrl.u32 %v736, 7
        %v738 = vsub.s32 %v735, %v737
        %v739 = vrot.slane %v723, %v738
        %v741 = vunpack.c.l.s4 1966171168
        %v742 = vunpack.c.0.s8 %v741
        %v743 = vlaneseq
        %v744 = vshrl.u32 %v743, 7
        %v745 = vsub.s32 %v742, %v744
        %v746 = vrot.slane %v730, %v745
        %v748 = vunpack.c.l.s4 1966171168
        %v749 = vunpack.c.0.s8 %v748
        %v750 = vlaneseq
        %v751 = vshrl.u32 %v750, 7
        %v752 = vsub.s32 %v749, %v751
        %v753 = vrot.slane %v731, %v752
        %v755 = vunpack.c.l.s4 1966171168
        %v756 = vunpack.c.0.s8 %v755
        %v757 = vlaneseq
        %v758 = vshrl.u32 %v757, 7
        %v759 = vsub.s32 %v756, %v758
        %v760 = vrot.slane %v732, %v759
        %v761 = vcombine.high %v739, %v739
        %v762 = vcombine.high %v746, %v746
        %v763 = vcombine.high %v753, %v753
        %v764 = vcombine.high %v760, %v760
        %v765 = vcombine.high %v413, %v413
        %v767 = vunpack.c.l.s4 1966171168
        %v768 = vunpack.c.0.s8 %v767
        %v769 = vlaneseq
        %v770 = vshrl.u32 %v769, 7
        %v771 = vsub.s32 %v768, %v770
        %v772 = vrot.slane %v413, %v771
        %v774 = vunpack.c.l.s4 1966171168
        %v775 = vunpack.c.0.s8 %v774
        %v776 = vlaneseq
        %v777 = vshrl.u32 %v776, 7
        %v778 = vsub.s32 %v775, %v777
        %v779 = vrot.slane %v765, %v778
        %v780 = vcombine.high %v772, %v772
        %v781 = vcombine.high %v779, %v779
        %v783 = vunpack.c.l.s4 1966171168
        %v784 = vunpack.c.0.s8 %v783
        %v785 = vlaneseq
        %v786 = vshrl.u32 %v785, 7
        %v787 = vsub.s32 %v784, %v786
        %v788 = vrot.slane %v772, %v787
        %v790 = vunpack.c.l.s4 1966171168
        %v791 = vunpack.c.0.s8 %v790
        %v792 = vlaneseq
        %v793 = vshrl.u32 %v792, 7
        %v794 = vsub.s32 %v791, %v793
        %v795 = vrot.slane %v779, %v794
        %v797 = vunpack.c.l.s4 1966171168
        %v798 = vunpack.c.0.s8 %v797
        %v799 = vlaneseq
        %v800 = vshrl.u32 %v799, 7
        %v801 = vsub.s32 %v798, %v800
        %v802 = vrot.slane %v780, %v801
        %v804 = vunpack.c.l.s4 1966171168
        %v805 = vunpack.c.0.s8 %v804
        %v806 = vlaneseq
        %v807 = vshrl.u32 %v806, 7
        %v808 = vsub.s32 %v805, %v807
        %v809 = vrot.slane %v781, %v808
        %v810 = vcombine.high %v788, %v788
        %v811 = vcombine.high %v795, %v795
        %v812 = vcombine.high %v802, %v802
        %v813 = vcombine.high %v809, %v809
        %v814 = vlaneseq
        %v815 = vshrl.u32 %v814, 7
        %v816 = vsub.s32 0, %v815
        %v817 = vrot.slane %v445, %v816
        %v818 = vlaneseq
        %v819 = vshrl.u32 %v818, 7
        %v820 = vsub.s32 0, %v819
        %v821 = vrot.slane %v459, %v820
        %v822 = vlaneseq
        %v823 = vshrl.u32 %v822, 7
        %v824 = vsub.s32 0, %v823
        %v825 = vrot.slane %v467, %v824
        %v826 = vlaneseq
        %v827 = vshrl.u32 %v826, 7
        %v828 = vsub.s32 0, %v827
        %v829 = vrot.slane %v469, %v828
        %v830 = vlaneseq
        %v831 = vshrl.u32 %v830, 7
        %v832 = vsub.s32 0, %v831
        %v833 = vrot.slane %v452, %v832
        %v834 = vlaneseq
        %v835 = vshrl.u32 %v834, 7
        %v836 = vsub.s32 0, %v835
        %v837 = vrot.slane %v466, %v836
        %v838 = vlaneseq
        %v839 = vshrl.u32 %v838, 7
        %v840 = vsub.s32 0, %v839
        %v841 = vrot.slane %v468, %v840
        %v842 = vlaneseq
        %v843 = vshrl.u32 %v842, 7
        %v844 = vsub.s32 0, %v843
        %v845 = vrot.slane %v470, %v844
        %v846 = vlaneseq
        %v847 = vshrl.u32 %v846, 7
        %v848 = vsub.s32 0, %v847
        %v849 = vrot.slane %v494, %v848
        %v850 = vlaneseq
        %v851 = vshrl.u32 %v850, 7
        %v852 = vsub.s32 0, %v851
        %v853 = vrot.slane %v508, %v852
        %v854 = vlaneseq
        %v855 = vshrl.u32 %v854, 7
        %v856 = vsub.s32 0, %v855
        %v857 = vrot.slane %v516, %v856
        %v858 = vlaneseq
        %v859 = vshrl.u32 %v858, 7
        %v860 = vsub.s32 0, %v859
        %v861 = vrot.slane %v518, %v860
        %v862 = vlaneseq
        %v863 = vshrl.u32 %v862, 7
        %v864 = vsub.s32 0, %v863
        %v865 = vrot.slane %v501, %v864
        %v866 = vlaneseq
        %v867 = vshrl.u32 %v866, 7
        %v868 = vsub.s32 0, %v867
        %v869 = vrot.slane %v515, %v868
        %v870 = vlaneseq
        %v871 = vshrl.u32 %v870, 7
        %v872 = vsub.s32 0, %v871
        %v873 = vrot.slane %v517, %v872
        %v874 = vlaneseq
        %v875 = vshrl.u32 %v874, 7
        %v876 = vsub.s32 0, %v875
        %v877 = vrot.slane %v519, %v876
        %v878 = vlaneseq
        %v879 = vshrl.u32 %v878, 7
        %v880 = vsub.s32 0, %v879
        %v881 = vrot.slane %v543, %v880
        %v882 = vlaneseq
        %v883 = vshrl.u32 %v882, 7
        %v884 = vsub.s32 0, %v883
        %v885 = vrot.slane %v557, %v884
        %v886 = vlaneseq
        %v887 = vshrl.u32 %v886, 7
        %v888 = vsub.s32 0, %v887
        %v889 = vrot.slane %v565, %v888
        %v890 = vlaneseq
        %v891 = vshrl.u32 %v890, 7
        %v892 = vsub.s32 0, %v891
        %v893 = vrot.slane %v567, %v892
        %v894 = vlaneseq
        %v895 = vshrl.u32 %v894, 7
        %v896 = vsub.s32 0, %v895
        %v897 = vrot.slane %v550, %v896
        %v898 = vlaneseq
        %v899 = vshrl.u32 %v898, 7
        %v900 = vsub.s32 0, %v899
        %v901 = vrot.slane %v564, %v900
        %v902 = vlaneseq
        %v903 = vshrl.u32 %v902, 7
        %v904 = vsub.s32 0, %v903
        %v905 = vrot.slane %v566, %v904
        %v906 = vlaneseq
        %v907 = vshrl.u32 %v906, 7
        %v908 = vsub.s32 0, %v907
        %v909 = vrot.slane %v568, %v908
        %v910 = vlaneseq
        %v911 = vshrl.u32 %v910, 7
        %v912 = vsub.s32 0, %v911
        %v913 = vrot.slane %v592, %v912
        %v914 = vlaneseq
        %v915 = vshrl.u32 %v914, 7
        %v916 = vsub.s32 0, %v915
        %v917 = vrot.slane %v606, %v916
        %v918 = vlaneseq
        %v919 = vshrl.u32 %v918, 7
        %v920 = vsub.s32 0, %v919
        %v921 = vrot.slane %v614, %v920
        %v922 = vlaneseq
        %v923 = vshrl.u32 %v922, 7
        %v924 = vsub.s32 0, %v923
        %v925 = vrot.slane %v616, %v924
        %v926 = vlaneseq
        %v927 = vshrl.u32 %v926, 7
        %v928 = vsub.s32 0, %v927
        %v929 = vrot.slane %v599, %v928
        %v930 = vlaneseq
        %v931 = vshrl.u32 %v930, 7
        %v932 = vsub.s32 0, %v931
        %v933 = vrot.slane %v613, %v932
        %v934 = vlaneseq
        %v935 = vshrl.u32 %v934, 7
        %v936 = vsub.s32 0, %v935
        %v937 = vrot.slane %v615, %v936
        %v938 = vlaneseq
        %v939 = vshrl.u32 %v938, 7
        %v940 = vsub.s32 0, %v939
        %v941 = vrot.slane %v617, %v940
        %v942 = vlaneseq
        %v943 = vshrl.u32 %v942, 7
        %v944 = vsub.s32 0, %v943
        %v945 = vrot.slane %v641, %v944
        %v946 = vlaneseq
        %v947 = vshrl.u32 %v946, 7
        %v948 = vsub.s32 0, %v947
        %v949 = vrot.slane %v655, %v948
        %v950 = vlaneseq
        %v951 = vshrl.u32 %v950, 7
        %v952 = vsub.s32 0, %v951
        %v953 = vrot.slane %v663, %v952
        %v954 = vlaneseq
        %v955 = vshrl.u32 %v954, 7
        %v956 = vsub.s32 0, %v955
        %v957 = vrot.slane %v665, %v956
        %v958 = vlaneseq
        %v959 = vshrl.u32 %v958, 7
        %v960 = vsub.s32 0, %v959
        %v961 = vrot.slane %v648, %v960
        %v962 = vlaneseq
        %v963 = vshrl.u32 %v962, 7
        %v964 = vsub.s32 0, %v963
        %v965 = vrot.slane %v662, %v964
        %v966 = vlaneseq
        %v967 = vshrl.u32 %v966, 7
        %v968 = vsub.s32 0, %v967
        %v969 = vrot.slane %v664, %v968
        %v970 = vlaneseq
        %v971 = vshrl.u32 %v970, 7
        %v972 = vsub.s32 0, %v971
        %v973 = vrot.slane %v666, %v972
        %v974 = vlaneseq
        %v975 = vshrl.u32 %v974, 7
        %v976 = vsub.s32 0, %v975
        %v977 = vrot.slane %v690, %v976
        %v978 = vlaneseq
        %v979 = vshrl.u32 %v978, 7
        %v980 = vsub.s32 0, %v979
        %v981 = vrot.slane %v704, %v980
        %v982 = vlaneseq
        %v983 = vshrl.u32 %v982, 7
        %v984 = vsub.s32 0, %v983
        %v985 = vrot.slane %v712, %v984
        %v986 = vlaneseq
        %v987 = vshrl.u32 %v986, 7
        %v988 = vsub.s32 0, %v987
        %v989 = vrot.slane %v714, %v988
        %v990 = vlaneseq
        %v991 = vshrl.u32 %v990, 7
        %v992 = vsub.s32 0, %v991
        %v993 = vrot.slane %v697, %v992
        %v994 = vlaneseq
        %v995 = vshrl.u32 %v994, 7
        %v996 = vsub.s32 0, %v995
        %v997 = vrot.slane %v711, %v996
        %v998 = vlaneseq
        %v999 = vshrl.u32 %v998, 7
        %v1000 = vsub.s32 0, %v999
        %v1001 = vrot.slane %v713, %v1000
        %v1002 = vlaneseq
        %v1003 = vshrl.u32 %v1002, 7
        %v1004 = vsub.s32 0, %v1003
        %v1005 = vrot.slane %v715, %v1004
        %v1006 = vlaneseq
        %v1007 = vshrl.u32 %v1006, 7
        %v1008 = vsub.s32 0, %v1007
        %v1009 = vrot.slane %v739, %v1008
        %v1010 = vlaneseq
        %v1011 = vshrl.u32 %v1010, 7
        %v1012 = vsub.s32 0, %v1011
        %v1013 = vrot.slane %v753, %v1012
        %v1014 = vlaneseq
        %v1015 = vshrl.u32 %v1014, 7
        %v1016 = vsub.s32 0, %v1015
        %v1017 = vrot.slane %v761, %v1016
        %v1018 = vlaneseq
        %v1019 = vshrl.u32 %v1018, 7
        %v1020 = vsub.s32 0, %v1019
        %v1021 = vrot.slane %v763, %v1020
        %v1022 = vlaneseq
        %v1023 = vshrl.u32 %v1022, 7
        %v1024 = vsub.s32 0, %v1023
        %v1025 = vrot.slane %v746, %v1024
        %v1026 = vlaneseq
        %v1027 = vshrl.u32 %v1026, 7
        %v1028 = vsub.s32 0, %v1027
        %v1029 = vrot.slane %v760, %v1028
        %v1030 = vlaneseq
        %v1031 = vshrl.u32 %v1030, 7
        %v1032 = vsub.s32 0, %v1031
        %v1033 = vrot.slane %v762, %v1032
        %v1034 = vlaneseq
        %v1035 = vshrl.u32 %v1034, 7
        %v1036 = vsub.s32 0, %v1035
        %v1037 = vrot.slane %v764, %v1036
        %v1038 = vlaneseq
        %v1039 = vshrl.u32 %v1038, 7
        %v1040 = vsub.s32 0, %v1039
        %v1041 = vrot.slane %v788, %v1040
        %v1042 = vlaneseq
        %v1043 = vshrl.u32 %v1042, 7
        %v1044 = vsub.s32 0, %v1043
        %v1045 = vrot.slane %v802, %v1044
        %v1046 = vlaneseq
        %v1047 = vshrl.u32 %v1046, 7
        %v1048 = vsub.s32 0, %v1047
        %v1049 = vrot.slane %v810, %v1048
        %v1050 = vlaneseq
        %v1051 = vshrl.u32 %v1050, 7
        %v1052 = vsub.s32 0, %v1051
        %v1053 = vrot.slane %v812, %v1052
        %v1054 = vlaneseq
        %v1055 = vshrl.u32 %v1054, 7
        %v1056 = vsub.s32 0, %v1055
        %v1057 = vrot.slane %v795, %v1056
        %v1058 = vlaneseq
        %v1059 = vshrl.u32 %v1058, 7
        %v1060 = vsub.s32 0, %v1059
        %v1061 = vrot.slane %v809, %v1060
        %v1062 = vlaneseq
        %v1063 = vshrl.u32 %v1062, 7
        %v1064 = vsub.s32 0, %v1063
        %v1065 = vrot.slane %v811, %v1064
        %v1066 = vlaneseq
        %v1067 = vshrl.u32 %v1066, 7
        %v1068 = vsub.s32 0, %v1067
        %v1069 = vrot.slane %v813, %v1068
        %v1134 = vmul.f32 %v817, %v315
        %v1135 = vmul.f32 %v821, %v315
        %v1136 = vmul.f32 %v825, %v315
        %v1137 = vmul.f32 %v829, %v315
        %v1138 = vmul.f32 %v833, %v315
        %v1139 = vmul.f32 %v837, %v315
        %v1140 = vmul.f32 %v841, %v315
        %v1141 = vmul.f32 %v845, %v315
        %v1142 = vmul.f32 %v849, %v315
        %v1143 = vmul.f32 %v853, %v315
        %v1144 = vmul.f32 %v857, %v315
        %v1145 = vmul.f32 %v861, %v315
        %v1146 = vmul.f32 %v865, %v315
        %v1147 = vmul.f32 %v869, %v315
        %v1148 = vmul.f32 %v873, %v315
        %v1149 = vmul.f32 %v877, %v315
        %v1150 = vmul.f32 %v881, %v315
        %v1151 = vmul.f32 %v885, %v315
        %v1152 = vmul.f32 %v889, %v315
        %v1153 = vmul.f32 %v893, %v315
        %v1154 = vmul.f32 %v897, %v315
        %v1155 = vmul.f32 %v901, %v315
        %v1156 = vmul.f32 %v905, %v315
        %v1157 = vmul.f32 %v909, %v315
        %v1158 = vmul.f32 %v913, %v315
        %v1159 = vmul.f32 %v917, %v315
        %v1160 = vmul.f32 %v921, %v315
        %v1161 = vmul.f32 %v925, %v315
        %v1162 = vmul.f32 %v929, %v315
        %v1163 = vmul.f32 %v933, %v315
        %v1164 = vmul.f32 %v937, %v315
        %v1165 = vmul.f32 %v941, %v315
        %v1166 = vmul.f32 %v945, %v315
        %v1167 = vmul.f32 %v949, %v315
        %v1168 = vmul.f32 %v953, %v315
        %v1169 = vmul.f32 %v957, %v315
        %v1170 = vmul.f32 %v961, %v315
        %v1171 = vmul.f32 %v965, %v315
        %v1172 = vmul.f32 %v969, %v315
        %v1173 = vmul.f32 %v973, %v315
        %v1174 = vmul.f32 %v977, %v315
        %v1175 = vmul.f32 %v981, %v315
        %v1176 = vmul.f32 %v985, %v315
        %v1177 = vmul.f32 %v989, %v315
        %v1178 = vmul.f32 %v993, %v315
        %v1179 = vmul.f32 %v997, %v315
        %v1180 = vmul.f32 %v1001, %v315
        %v1181 = vmul.f32 %v1005, %v315
        %v1182 = vmul.f32 %v1009, %v315
        %v1183 = vmul.f32 %v1013, %v315
        %v1184 = vmul.f32 %v1017, %v315
        %v1185 = vmul.f32 %v1021, %v315
        %v1186 = vmul.f32 %v1025, %v315
        %v1187 = vmul.f32 %v1029, %v315
        %v1188 = vmul.f32 %v1033, %v315
        %v1189 = vmul.f32 %v1037, %v315
        %v1190 = vmul.f32 %v1041, %v315
        %v1191 = vmul.f32 %v1045, %v315
        %v1192 = vmul.f32 %v1049, %v315
        %v1193 = vmul.f32 %v1053, %v315
        %v1194 = vmul.f32 %v1057, %v315
        %v1195 = vmul.f32 %v1061, %v315
        %v1196 = vmul.f32 %v1065, %v315
        %v1197 = vmul.f32 %v1069, %v315
        %1198 = vmatprep.subr.mxu0 0.0
        %1199 = vmatpush1.msra.mxu0 %v1134
        %1200 = vmatprep.subr.mxu0 0.0
        %1201 = vmatpush1.msra.mxu0 %v1135
        %1202 = vmatprep.subr.mxu0 0.0
        %1203 = vmatpush1.msra.mxu0 %v1136
        %1204 = vmatprep.subr.mxu0 0.0
        %1205 = vmatpush1.msra.mxu0 %v1137
        %1206 = vmatprep.subr.mxu0 0.0
        %1207 = vmatpush1.msra.mxu0 %v1138
        %1208 = vmatprep.subr.mxu0 0.0
        %1209 = vmatpush1.msra.mxu0 %v1139
        %1210 = vmatprep.subr.mxu0 0.0
        %1211 = vmatpush1.msra.mxu0 %v1140
        %1212 = vmatprep.subr.mxu0 0.0
        %1213 = vmatpush1.msra.mxu0 %v1141
        %1214 = vmatprep.subr.mxu0 0.0
        %1215 = vmatpush1.msra.mxu0 %v1142
        %1216 = vmatprep.subr.mxu0 0.0
        %1217 = vmatpush1.msra.mxu0 %v1143
        %1218 = vmatprep.subr.mxu0 0.0
        %1219 = vmatpush1.msra.mxu0 %v1144
        %1220 = vmatprep.subr.mxu0 0.0
        %1221 = vmatpush1.msra.mxu0 %v1145
        %1222 = vmatprep.subr.mxu0 0.0
        %1223 = vmatpush1.msra.mxu0 %v1146
        %1224 = vmatprep.subr.mxu0 0.0
        %1225 = vmatpush1.msra.mxu0 %v1147
        %1226 = vmatprep.subr.mxu0 0.0
        %1227 = vmatpush1.msra.mxu0 %v1148
        %1228 = vmatprep.subr.mxu0 0.0
        %1229 = vmatpush1.msra.mxu0 %v1149
        %1230 = vmatprep.subr.mxu0 0.0
        %1231 = vmatpush1.msra.mxu0 %v1150
        %1232 = vmatprep.subr.mxu0 0.0
        %1233 = vmatpush1.msra.mxu0 %v1151
        %1234 = vmatprep.subr.mxu0 0.0
        %1235 = vmatpush1.msra.mxu0 %v1152
        %1236 = vmatprep.subr.mxu0 0.0
        %1237 = vmatpush1.msra.mxu0 %v1153
        %1238 = vmatprep.subr.mxu0 0.0
        %1239 = vmatpush1.msra.mxu0 %v1154
        %1240 = vmatprep.subr.mxu0 0.0
        %1241 = vmatpush1.msra.mxu0 %v1155
        %1242 = vmatprep.subr.mxu0 0.0
        %1243 = vmatpush1.msra.mxu0 %v1156
        %1244 = vmatprep.subr.mxu0 0.0
        %1245 = vmatpush1.msra.mxu0 %v1157
        %1246 = vmatprep.subr.mxu0 0.0
        %1247 = vmatpush1.msra.mxu0 %v1158
        %1248 = vmatprep.subr.mxu0 0.0
        %1249 = vmatpush1.msra.mxu0 %v1159
        %1250 = vmatprep.subr.mxu0 0.0
        %1251 = vmatpush1.msra.mxu0 %v1160
        %1252 = vmatprep.subr.mxu0 0.0
        %1253 = vmatpush1.msra.mxu0 %v1161
        %1254 = vmatprep.subr.mxu0 0.0
        %1255 = vmatpush1.msra.mxu0 %v1162
        %1256 = vmatprep.subr.mxu0 0.0
        %1257 = vmatpush1.msra.mxu0 %v1163
        %1258 = vmatprep.subr.mxu0 0.0
        %1259 = vmatpush1.msra.mxu0 %v1164
        %1260 = vmatprep.subr.mxu0 0.0
        %1261 = vmatpush1.msra.mxu0 %v1165
        %1262 = vmatprep.mubr.f32.mxu0 %v240
        %1263 = vmatmul.mubr.f32.gmra.mrb[0].mxu0 %v239
        %v1264 = vpop.f32.mrb[0].mxu0
        %v1265 = vadd.f32 0.0, %v1264
        %v1266 = vpop.f32.mrb[0].mxu0
        %1267 = vdwg.mxu0
        %1268 = vmatprep.subr.mxu0 0.0
        %1269 = vmatpush1.msra.mxu0 %v1166
        %1270 = vmatprep.subr.mxu0 0.0
        %1271 = vmatpush1.msra.mxu0 %v1167
        %1272 = vmatprep.subr.mxu0 0.0
        %1273 = vmatpush1.msra.mxu0 %v1168
        %1274 = vmatprep.subr.mxu0 0.0
        %1275 = vmatpush1.msra.mxu0 %v1169
        %1276 = vmatprep.subr.mxu0 0.0
        %1277 = vmatpush1.msra.mxu0 %v1170
        %1278 = vmatprep.subr.mxu0 0.0
        %1279 = vmatpush1.msra.mxu0 %v1171
        %1280 = vmatprep.subr.mxu0 0.0
        %1281 = vmatpush1.msra.mxu0 %v1172
        %1282 = vmatprep.subr.mxu0 0.0
        %1283 = vmatpush1.msra.mxu0 %v1173
        %1284 = vmatprep.subr.mxu0 0.0
        %1285 = vmatpush1.msra.mxu0 %v1174
        %1286 = vmatprep.subr.mxu0 0.0
        %1287 = vmatpush1.msra.mxu0 %v1175
        %1288 = vmatprep.subr.mxu0 0.0
        %1289 = vmatpush1.msra.mxu0 %v1176
        %1290 = vmatprep.subr.mxu0 0.0
        %1291 = vmatpush1.msra.mxu0 %v1177
        %1292 = vmatprep.subr.mxu0 0.0
        %1293 = vmatpush1.msra.mxu0 %v1178
        %1294 = vmatprep.subr.mxu0 0.0
        %1295 = vmatpush1.msra.mxu0 %v1179
        %1296 = vmatprep.subr.mxu0 0.0
        %1297 = vmatpush1.msra.mxu0 %v1180
        %1298 = vmatprep.subr.mxu0 0.0
        %1299 = vmatpush1.msra.mxu0 %v1181
        %1300 = vmatprep.subr.mxu0 0.0
        %1301 = vmatpush1.msra.mxu0 %v1182
        %1302 = vmatprep.subr.mxu0 0.0
        %1303 = vmatpush1.msra.mxu0 %v1183
        %1304 = vmatprep.subr.mxu0 0.0
        %1305 = vmatpush1.msra.mxu0 %v1184
        %1306 = vmatprep.subr.mxu0 0.0
        %1307 = vmatpush1.msra.mxu0 %v1185
        %1308 = vmatprep.subr.mxu0 0.0
        %1309 = vmatpush1.msra.mxu0 %v1186
        %1310 = vmatprep.subr.mxu0 0.0
        %1311 = vmatpush1.msra.mxu0 %v1187
        %1312 = vmatprep.subr.mxu0 0.0
        %1313 = vmatpush1.msra.mxu0 %v1188
        %1314 = vmatprep.subr.mxu0 0.0
        %1315 = vmatpush1.msra.mxu0 %v1189
        %1316 = vmatprep.subr.mxu0 0.0
        %1317 = vmatpush1.msra.mxu0 %v1190
        %1318 = vmatprep.subr.mxu0 0.0
        %1319 = vmatpush1.msra.mxu0 %v1191
        %1320 = vmatprep.subr.mxu0 0.0
        %1321 = vmatpush1.msra.mxu0 %v1192
        %1322 = vmatprep.subr.mxu0 0.0
        %1323 = vmatpush1.msra.mxu0 %v1193
        %1324 = vmatprep.subr.mxu0 0.0
        %1325 = vmatpush1.msra.mxu0 %v1194
        %1326 = vmatprep.subr.mxu0 0.0
        %1327 = vmatpush1.msra.mxu0 %v1195
        %1328 = vmatprep.subr.mxu0 0.0
        %1329 = vmatpush1.msra.mxu0 %v1196
        %1330 = vmatprep.subr.mxu0 0.0
        %1331 = vmatpush1.msra.mxu0 %v1197
        %1332 = vmatprep.mubr.f32.mxu0 %v242
        %1333 = vmatmul.mubr.f32.gmra.mrb[0].mxu0 %v241
        %v1334 = vpop.f32.mrb[0].mxu0
        %v1335 = vadd.f32 %v1265, %v1334
        %v1336 = vpop.f32.mrb[0].mxu0
        %1337 = vdwg.mxu0
        %v1338 = vld [vmem:[%s238] sm:$0xff]
        %1339 = vst [vmem:[%s219] sm:$0xff] %v1338
        %1340 = vst [vmem:[%s219 + $0x8] sm:$0xff] %v1335
        %s1341 = sand.u32 %s121, 1
        %s1342 = scalar_lea.sflag [#allocation3], %s1341
        %s1343 = sand.u32 %s121, 1
        %s1344 = smul.addr %s1343, 16
        %s1345 = scalar_lea.vmem [#allocation2], %s1344
        // Predicated region
        $region33: #{feature_voxel_concatenation.5} parent=31 // pred_check
          %p1346 = pneg %p131
        $region34: #{feature_voxel_concatenation.5} parent=31 // pred_check_branch
          %1348 = sbr.rel (%p1346) target = $region36
        $region35: #{feature_voxel_concatenation.5} parent=31 // pred_region
          %s1350 = ssub.s32 256, 256
          %1351 = vsyncadd %s1342, %s1350
          %s1352 = smul.addr %s21, 2
          %s1353 = sadd.s32 %s22, %s1352
          %s1354 = smul.addr %s1353, 128
          %s1355 = scalar_lea.hbm %s3, %s1354
          %s1356 = sshll.u32 %s1345, 4
          %s1357 = int_to_ptr.vmem [resolvable:$true] %s1356
          %1362 = dma.vmem_to_hbm [thread:$0]  %s1357, 256, %s1355, %s1342, 128, 128, 8
        $region36: #{feature_voxel_concatenation.5} parent=31 // pred_fallthru
          _
      $region32: #{feature_voxel_concatenation.5} parent=5 // pred_fallthru
        _
      %p1363 = scmp.le.s32.totalorder 2, %s12
      // Predicated region
      $region37: #{feature_voxel_concatenation.5} parent=5 // pred_check
        %p1364 = pneg %p1363
      $region38: #{feature_voxel_concatenation.5} parent=5 // pred_check_branch
        %1366 = sbr.rel (%p1364) target = $region40
      $region39: #{feature_voxel_concatenation.5} parent=5 // pred_region
        %s1367 = ssub.s32 %s12, 2
        // Predicated region
        $region41: #{feature_voxel_concatenation.5} parent=39 // pred_check
          %p1368 = pneg %p137
        $region42: #{feature_voxel_concatenation.5} parent=39 // pred_check_branch
          %1370 = sbr.rel (%p1368) target = $region44
        $region43: #{feature_voxel_concatenation.5} parent=39 // pred_region
          %s1371 = sand.u32 %s122, 1
          %s1372 = scalar_lea.sflag [#allocation3], %s1371
          %s1373 = sand.u32 %s122, 1
          %s1374 = smul.addr %s1373, 16
          %s1375 = scalar_lea.vmem [#allocation2], %s1374
          %1376 = dma.done %s1372, 256
        $region44: #{feature_voxel_concatenation.5} parent=39 // pred_fallthru
          _
      $region40: #{feature_voxel_concatenation.5} parent=5 // pred_fallthru
        _
    $region6: #{feature_voxel_concatenation.5} parent=1 // loop_footer
      %s16 = sadd.s32 1, %s12
    $region7: #{feature_voxel_concatenation.5} parent=1 // loop_footer_branch
      %11 = sbr.rel target = $region3
    $region8: #{feature_voxel_concatenation.5} parent=1 // loop_exit
      _
    %1377 = vsyncpa [#allocation3], 1
    %s1378 = scalar_lea.sflag [#allocation3], 1
    %1379 = vsyncpa %s1378, 1

</llo_original>
